<compile_context>
chip_gen: v6e
topology: v6e:2x2x1
jax: 0.10.0
libtpu: 0.0.40
codegen_flags: <defaults>
</compile_context>

<pallas_src>
import functools

import jax
import jax.numpy as jnp
from jax import lax
from jax.experimental import pallas as pl
from jax.experimental.pallas import tpu as pltpu


def _rgru_layer_kernel(gx_ref, wht_ref, mask_ref, y_ref, h_ref, *,
                       t_blk, width, c_out, mxu_dtype):
    """One grid step == (one batch block, one block of t_blk timesteps).

    Lane-dense layout: N = b_blk*H*W in the lane (last) dim, channels in
    sublanes.  Hidden state h is an unpadded (C_out, N) tile carried in VMEM
    scratch across the (inner, "arbitrary") time grid axis.  Only the
    recurrent branch (one MXU matmul, K = 9*C_out) runs in-kernel; the
    x-branch gates gx are precomputed in XLA and streamed in.
    """
    tb = pl.program_id(1)

    @pl.when(tb == 0)
    def _():                                   # new batch block -> h = 0
        h_ref[...] = jnp.zeros_like(h_ref)

    # Loop-invariant operands, read once per grid step (constant index_map ->
    # not re-DMA'd across the grid).
    wht = wht_ref[...]                         # (3*C_out, 9*C_out), mxu_dtype
    masks = mask_ref[...]                      # (9, C_out, N) in {0, 1}, f32

    n_lane = h_ref.shape[1]
    c = c_out

    def step(tt, h):
        gx = gx_ref[0, tt].astype(jnp.float32)            # (3*C_out, N)

        # Recurrent-branch im2col via lane rolls (XLU) + prebuilt vreg-shaped
        # masks (VPU): stays in (8,128) layout, no reshapes, no broadcasts,
        # no padded-border scratch.
        cols = []
        for tap in range(9):
            dh, dw = tap // 3 - 1, tap % 3 - 1
            if dh == 0 and dw == 0:
                cols.append(h)
                continue
            s = dh * width + dw                # flat lane shift for this tap
            shifted = pltpu.roll(h, shift=(-s) % n_lane, axis=1)
            cols.append(shifted * masks[tap])  # (C_out, N) * (C_out, N)
        hcol = jnp.concatenate(cols, axis=0).astype(mxu_dtype)   # (9*C_out, N)

        # Single MXU matmul per timestep, output (3*C_out, N) lane-dense.
        gh = jnp.dot(wht, hcol, preferred_element_type=jnp.float32)

        forgetgate = jax.nn.sigmoid(gx[0:c] + gh[0:c])
        outgate = jax.nn.sigmoid(gx[c:2 * c] + gh[c:2 * c])
        cellgate = jnp.tanh(gx[2 * c:3 * c] + forgetgate * gh[2 * c:3 * c])
        h = (1.0 - outgate) * cellgate + outgate * h             # f32 gate math

        y_ref[0, tt] = h.astype(y_ref.dtype)   # unmasked, lane-dense store
        return h

    # fori_loop bounds live ranges / code size; unroll=True keeps the short
    # fixed trip count visible to the LLO scheduler.
    h_ref[...] = lax.fori_loop(0, t_blk, step, h_ref[...], unroll=True)


def _tap_masks(H, W, b_blk, dtype=jnp.float32):
    """{0,1} validity masks for the 9 shifted taps, tiled per image: (9, b_blk*H*W)."""
    hh = jnp.arange(H)[:, None]
    ww = jnp.arange(W)[None, :]
    mlist = []
    for tap in range(9):
        dh, dw = tap // 3 - 1, tap % 3 - 1
        m = ((hh + dh >= 0) & (hh + dh < H) & (ww + dw >= 0) & (ww + dw < W))
        mlist.append(m.reshape(H * W))
    masks = jnp.stack(mlist, 0).astype(dtype)          # (9, H*W)
    return jnp.tile(masks, (1, b_blk))                 # (9, b_blk*H*W)


def _im2col_lane_major(x, masks_n, width):
    """Lane-major im2col (XLA). x: (..., C, N), masks_n: (9, N) -> (..., 9*C, N)."""
    cols = []
    for tap in range(9):
        dh, dw = tap // 3 - 1, tap % 3 - 1
        if dh == 0 and dw == 0:
            cols.append(x)
            continue
        s = dh * width + dw
        cols.append(jnp.roll(x, shift=-s, axis=-1) * masks_n[tap])
    return jnp.concatenate(cols, axis=-2)


def rgru_layer(x_lm, wx, wh, masks_n, H, W, *, t_blk=8, mxu_dtype=jnp.float32):
    """One RGRU layer over the whole sequence, lane-major in and out.
    x_lm: (n_bb, T, C_in, n_blk) with n_blk = b_blk*H*W -> (n_bb, T, C_out, n_blk)."""
    n_bb, T, C_in, n_blk = x_lm.shape
    C_out = wh.shape[2]
    CG, KH = 3 * C_out, 9 * C_out

    # ---- x branch in plain XLA: one big batched matmul over all T (no
    #      recurrence -> does not belong inside the serial kernel).
    xcol = _im2col_lane_major(x_lm, masks_n, W)              # (n_bb,T,9*C_in,n_blk)
    wx2 = wx.reshape(9 * C_in, CG)
    if mxu_dtype == jnp.float32:
        gx = jnp.einsum('kg,btkn->btgn', wx2, xcol,
                        precision=lax.Precision.HIGHEST,
                        preferred_element_type=jnp.float32)
        stream_dtype = jnp.float32
    else:
        # bf16 operands (MXU-native on v6e/v7x); f32 accumulation; streamed gx
        # cast in the wrapper so DMA bytes are actually halved.
        gx = jnp.einsum('kg,btkn->btgn', wx2.astype(mxu_dtype),
                        xcol.astype(mxu_dtype),
                        preferred_element_type=jnp.float32)
        stream_dtype = mxu_dtype
    gx = gx.astype(stream_dtype)                             # (n_bb,T,CG,n_blk)

    # ---- time blocking
    t_blk = max(1, min(t_blk, T))
    n_tb = -(-T // t_blk)
    t_pad = n_tb * t_blk
    if t_pad != T:                                           # tail timesteps discarded below
        gx = jnp.pad(gx, ((0, 0), (0, t_pad - T), (0, 0), (0, 0)))

    # ---- kernel-side constants
    wht = wh.reshape(KH, CG).T.astype(mxu_dtype)             # (3*C_out, 9*C_out)
    masks3 = jnp.broadcast_to(
        masks_n[:, None, :], (9, C_out, n_blk)).astype(jnp.float32)

    # ---- explicit VMEM budget (v5e scoped default 16 MiB; v7x physical 64 MiB)
    bpe_in = jnp.dtype(stream_dtype).itemsize
    est = (2 * t_blk * CG * n_blk * bpe_in        # gx, double-buffered
           + 2 * t_blk * C_out * n_blk * 4        # y, double-buffered
           + CG * KH * jnp.dtype(mxu_dtype).itemsize
           + 9 * C_out * n_blk * 4                # masks
           + C_out * n_blk * 4)                   # h scratch
    vmem_limit = int(min(max(4 * est, 16 * 2**20), 64 * 2**20))

    kernel = functools.partial(_rgru_layer_kernel, t_blk=t_blk, width=W,
                               c_out=C_out, mxu_dtype=mxu_dtype)
    y = pl.pallas_call(
        kernel,
        out_shape=jax.ShapeDtypeStruct((n_bb, t_pad, C_out, n_blk), jnp.float32),
        grid_spec=pltpu.PrefetchScalarGridSpec(
            num_scalar_prefetch=0,
            grid=(n_bb, n_tb),
            in_specs=[
                pl.BlockSpec((1, t_blk, CG, n_blk), lambda b, t: (b, t, 0, 0)),
                pl.BlockSpec((CG, KH), lambda b, t: (0, 0)),
                pl.BlockSpec((9, C_out, n_blk), lambda b, t: (0, 0, 0)),
            ],
            out_specs=pl.BlockSpec((1, t_blk, C_out, n_blk),
                                   lambda b, t: (b, t, 0, 0)),
            scratch_shapes=[pltpu.VMEM((C_out, n_blk), jnp.float32)],
        ),
        compiler_params=pltpu.CompilerParams(
            # batch blocks independent -> parallel (sharded across v7x's 2 TCs);
            # hidden state carried across the time axis -> arbitrary.
            dimension_semantics=("parallel", "arbitrary"),
            vmem_limit_bytes=vmem_limit),
    )(gx, wht, masks3)

    return y[:, :T]                                          # drop padded tail


def rgru_forward(x_btchw, params, *, t_blk=8, b_blk=None, mxu_dtype=jnp.float32):
    """RGRUCell.forward. x_btchw: (B, T, C_in, H, W) PyTorch layout.
    params: list of (wx, wh) per layer. Returns (B, T, C_out, H, W)."""
    x = x_btchw.astype(jnp.float32)
    B, T, C_in, H, W = x.shape
    HW = H * W

    if b_blk is None:
        b_blk = B
        # v7x: give the "parallel" batch axis >= 2 blocks (one per TensorCore)
        # whenever each block stays lane-dense (multiple of 128 lanes).
        if B % 2 == 0 and ((B // 2) * HW) % 128 == 0:
            b_blk = B // 2
    assert B % b_blk == 0 and (b_blk * HW) % 128 == 0, \
        "b_blk*H*W must be a multiple of 128 for lane-dense, unmasked stores"
    n_bb = B // b_blk

    masks_n = _tap_masks(H, W, b_blk)                        # (9, b_blk*HW)

    # (B,T,C,H,W) -> lane-major (n_bb, T, C, b_blk*H*W) once; activations stay
    # in this layout across all layers (no per-layer NCHW round trips).
    x = x.reshape(n_bb, b_blk, T, C_in, HW)
    x = jnp.transpose(x, (0, 2, 3, 1, 4)).reshape(n_bb, T, C_in, b_blk * HW)

    for wx, wh in params:
        # mxu_dtype=jnp.bfloat16 roughly doubles MXU throughput and halves the
        # streamed gx bytes on v6e/v7x; kept f32 by default to match the
        # PyTorch module's numerics exactly.
        x = rgru_layer(x, wx, wh, masks_n, H, W, t_blk=t_blk, mxu_dtype=mxu_dtype)
        # dropout p == 0 -> identity

    C_out = x.shape[2]
    y = x.reshape(n_bb, T, C_out, b_blk, HW)
    y = jnp.transpose(y, (0, 3, 1, 2, 4)).reshape(B, T, C_out, H, W)
    return y


def rgru_reference(x_btchw, params):
    """Pure-JAX reference matching the PyTorch RGRUCell math (NCHW convs)."""
    x = x_btchw.astype(jnp.float32)
    B, T = x.shape[0], x.shape[1]
    H, W = x.shape[3], x.shape[4]
    for wx, wh in params:
        C_out = wh.shape[2]
        wx_oihw = jnp.transpose(wx, (3, 2, 0, 1))
        wh_oihw = jnp.transpose(wh, (3, 2, 0, 1))
        h = jnp.zeros((B, C_out, H, W), jnp.float32)
        ys = []
        for t in range(T):
            gx = lax.conv_general_dilated(
                x[:, t], wx_oihw, (1, 1), ((1, 1), (1, 1)),
                dimension_numbers=('NCHW', 'OIHW', 'NCHW'),
                precision=lax.Precision.HIGHEST)
            gh = lax.conv_general_dilated(
                h, wh_oihw, (1, 1), ((1, 1), (1, 1)),
                dimension_numbers=('NCHW', 'OIHW', 'NCHW'),
                precision=lax.Precision.HIGHEST)
            gx_r, gx_z, gx_n = jnp.split(gx, 3, axis=1)
            gh_r, gh_z, gh_n = jnp.split(gh, 3, axis=1)
            forgetgate = jax.nn.sigmoid(gx_r + gh_r)
            outgate = jax.nn.sigmoid(gx_z + gh_z)
            cellgate = jnp.tanh(gx_n + forgetgate * gh_n)
            h = (1.0 - outgate) * cellgate + outgate * h
            ys.append(h)
        x = jnp.stack(ys, axis=1)
    return x


if __name__ == "__main__":
    # cell_info: input_size=4, output_size=8, num_layers=2, kernel=3, stride=1,
    #            padding=1, bias=False, activation='tanh', dropout=0, sharing_rates=0
    B, T, C_in, H, W = 2, 8, 4, 8, 8          # B*H*W = 128 -> lane-dense tiles
    C_out, num_layers = 8, 2

    key = jax.random.PRNGKey(0)
    kx, *wkeys = jax.random.split(key, 1 + 2 * num_layers)
    x = jax.random.normal(kx, (B, T, C_in, H, W), jnp.float32)

    params = []
    c_prev = C_in
    for i in range(num_layers):
        wx = 0.2 * jax.random.normal(wkeys[2 * i], (3, 3, c_prev, 3 * C_out),
                                     jnp.float32)
        wh = 0.2 * jax.random.normal(wkeys[2 * i + 1], (3, 3, C_out, 3 * C_out),
                                     jnp.float32)
        params.append((wx, wh))
        c_prev = C_out

    out = jax.block_until_ready(jax.jit(rgru_forward)(x, params))
    ref = jax.block_until_ready(rgru_reference(x, params))

    assert out.shape == (B, T, C_out, H, W), out.shape
    assert jnp.allclose(out, ref, atol=3e-3, rtol=3e-3), \
        float(jnp.max(jnp.abs(out - ref)))
    print("KERNEL_OK")
</pallas_src>

<mosaic_0001>
module attributes {stable_mosaic.version = 11 : i64} {
  func.func @_rgru_layer_kernel(%arg0: i32, %arg1: i32, %arg2: memref<1x8x24x128xf32, #tpu.memory_space<vmem>>, %arg3: memref<24x72xf32, #tpu.memory_space<vmem>>, %arg4: memref<9x8x128xf32, #tpu.memory_space<vmem>>, %arg5: memref<1x8x8x128xf32, #tpu.memory_space<vmem>>, %arg6: memref<8x128xf32, #tpu.memory_space<vmem>>) attributes {dimension_semantics = [#tpu.dimension_semantics<parallel>, #tpu.dimension_semantics<arbitrary>], iteration_bounds = array<i64: 1, 1>, scalar_prefetch = 0 : i64, scratch_operands = 1 : i64, tpu.core_type = #tpu.core_type<tc>, window_params = [{transform_indices = @transform_0, window_bounds = array<i64: 1, 8, 24, 128>}, {pipeline_mode = #tpu.pipeline_mode<synchronous>, transform_indices = @transform_1, window_bounds = array<i64: 24, 72>}, {pipeline_mode = #tpu.pipeline_mode<synchronous>, transform_indices = @transform_2, window_bounds = array<i64: 9, 8, 128>}, {transform_indices = @transform_3, window_bounds = array<i64: 1, 8, 8, 128>}]} {
    %c0_i32 = arith.constant 0 : i32
    %0 = arith.cmpi eq, %arg1, %c0_i32 : i32
    %1 = arith.extui %0 : i1 to i32
    %c0_i32_0 = arith.constant 0 : i32
    %2 = arith.cmpi ne, %1, %c0_i32_0 : i32
    scf.if %2 {
      %cst_148 = arith.constant 0.000000e+00 : f32
      %543 = vector.broadcast %cst_148 : f32 to vector<8x128xf32>
      %c0_149 = arith.constant 0 : index
      %c0_150 = arith.constant 0 : index
      %544 = vector.load %arg6[%c0_149, %c0_150] : memref<8x128xf32, #tpu.memory_space<vmem>>, vector<8x128xf32>
      tpu.vector_store %arg6[%c0_149, %c0_150], %543 {strides = array<i32>} : memref<8x128xf32, #tpu.memory_space<vmem>>, vector<8x128xf32>,
    } else {
    }
    %c0 = arith.constant 0 : index
    %c0_1 = arith.constant 0 : index
    %3 = vector.load %arg3[%c0, %c0_1] : memref<24x72xf32, #tpu.memory_space<vmem>>, vector<24x72xf32>
    %c0_2 = arith.constant 0 : index
    %c0_3 = arith.constant 0 : index
    %c0_4 = arith.constant 0 : index
    %4 = vector.load %arg4[%c0_2, %c0_3, %c0_4] : memref<9x8x128xf32, #tpu.memory_space<vmem>>, vector<9x8x128xf32>
    %c0_5 = arith.constant 0 : index
    %c0_6 = arith.constant 0 : index
    %5 = vector.load %arg6[%c0_5, %c0_6] : memref<8x128xf32, #tpu.memory_space<vmem>>, vector<8x128xf32>
    %c0_i32_7 = arith.constant 0 : i32
    %c0_8 = arith.constant 0 : index
    %6 = arith.index_cast %c0_i32_7 : i32 to index
    %c0_9 = arith.constant 0 : index
    %c0_10 = arith.constant 0 : index
    %7 = vector.load %arg2[%c0_8, %6, %c0_9, %c0_10] : memref<1x8x24x128xf32, #tpu.memory_space<vmem>>, vector<1x1x24x128xf32>
    %8 = vector.shape_cast %7 : vector<1x1x24x128xf32> to vector<24x128xf32>
    %c9_i32 = arith.constant 9 : i32
    %9 = tpu.dynamic_rotate %5 by %c9_i32 dim 1 : vector<8x128xf32>, i32 -> vector<8x128xf32>
    %10 = vector.extract_strided_slice %4 {offsets = [0, 0, 0], sizes = [1, 8, 128], strides = [1, 1, 1]} : vector<9x8x128xf32> to vector<1x8x128xf32>
    %11 = vector.shape_cast %10 : vector<1x8x128xf32> to vector<8x128xf32>
    %12 = arith.mulf %9, %11 : vector<8x128xf32>
    %c8_i32 = arith.constant 8 : i32
    %13 = tpu.dynamic_rotate %5 by %c8_i32 dim 1 : vector<8x128xf32>, i32 -> vector<8x128xf32>
    %14 = vector.extract_strided_slice %4 {offsets = [1, 0, 0], sizes = [1, 8, 128], strides = [1, 1, 1]} : vector<9x8x128xf32> to vector<1x8x128xf32>
    %15 = vector.shape_cast %14 : vector<1x8x128xf32> to vector<8x128xf32>
    %16 = arith.mulf %13, %15 : vector<8x128xf32>
    %c7_i32 = arith.constant 7 : i32
    %17 = tpu.dynamic_rotate %5 by %c7_i32 dim 1 : vector<8x128xf32>, i32 -> vector<8x128xf32>
    %18 = vector.extract_strided_slice %4 {offsets = [2, 0, 0], sizes = [1, 8, 128], strides = [1, 1, 1]} : vector<9x8x128xf32> to vector<1x8x128xf32>
    %19 = vector.shape_cast %18 : vector<1x8x128xf32> to vector<8x128xf32>
    %20 = arith.mulf %17, %19 : vector<8x128xf32>
    %c1_i32 = arith.constant 1 : i32
    %21 = tpu.dynamic_rotate %5 by %c1_i32 dim 1 : vector<8x128xf32>, i32 -> vector<8x128xf32>
    %22 = vector.extract_strided_slice %4 {offsets = [3, 0, 0], sizes = [1, 8, 128], strides = [1, 1, 1]} : vector<9x8x128xf32> to vector<1x8x128xf32>
    %23 = vector.shape_cast %22 : vector<1x8x128xf32> to vector<8x128xf32>
    %24 = arith.mulf %21, %23 : vector<8x128xf32>
    %c127_i32 = arith.constant 127 : i32
    %25 = tpu.dynamic_rotate %5 by %c127_i32 dim 1 : vector<8x128xf32>, i32 -> vector<8x128xf32>
    %26 = vector.extract_strided_slice %4 {offsets = [5, 0, 0], sizes = [1, 8, 128], strides = [1, 1, 1]} : vector<9x8x128xf32> to vector<1x8x128xf32>
    %27 = vector.shape_cast %26 : vector<1x8x128xf32> to vector<8x128xf32>
    %28 = arith.mulf %25, %27 : vector<8x128xf32>
    %c121_i32 = arith.constant 121 : i32
    %29 = tpu.dynamic_rotate %5 by %c121_i32 dim 1 : vector<8x128xf32>, i32 -> vector<8x128xf32>
    %30 = vector.extract_strided_slice %4 {offsets = [6, 0, 0], sizes = [1, 8, 128], strides = [1, 1, 1]} : vector<9x8x128xf32> to vector<1x8x128xf32>
    %31 = vector.shape_cast %30 : vector<1x8x128xf32> to vector<8x128xf32>
    %32 = arith.mulf %29, %31 : vector<8x128xf32>
    %c120_i32 = arith.constant 120 : i32
    %33 = tpu.dynamic_rotate %5 by %c120_i32 dim 1 : vector<8x128xf32>, i32 -> vector<8x128xf32>
    %34 = vector.extract_strided_slice %4 {offsets = [7, 0, 0], sizes = [1, 8, 128], strides = [1, 1, 1]} : vector<9x8x128xf32> to vector<1x8x128xf32>
    %35 = vector.shape_cast %34 : vector<1x8x128xf32> to vector<8x128xf32>
    %36 = arith.mulf %33, %35 : vector<8x128xf32>
    %c119_i32 = arith.constant 119 : i32
    %37 = tpu.dynamic_rotate %5 by %c119_i32 dim 1 : vector<8x128xf32>, i32 -> vector<8x128xf32>
    %38 = vector.extract_strided_slice %4 {offsets = [8, 0, 0], sizes = [1, 8, 128], strides = [1, 1, 1]} : vector<9x8x128xf32> to vector<1x8x128xf32>
    %39 = vector.shape_cast %38 : vector<1x8x128xf32> to vector<8x128xf32>
    %40 = arith.mulf %37, %39 : vector<8x128xf32>
    %41 = tpu.concatenate %12, %16, %20, %24, %5, %28, %32, %36, %40 in 0 : vector<8x128xf32>, vector<8x128xf32>, vector<8x128xf32>, vector<8x128xf32>, vector<8x128xf32>, vector<8x128xf32>, vector<8x128xf32>, vector<8x128xf32>, vector<8x128xf32> -> vector<72x128xf32>
    %cst = arith.constant dense<0.000000e+00> : vector<24x128xf32>
    %42 = tpu.matmul %3, %41, %cst {dimension_numbers = #tpu.dot_dimension_numbers<[1], [0], [0], [1], [0, 0, 1, 1], [], []>} : vector<24x72xf32>, vector<72x128xf32>, vector<24x128xf32> -> vector<24x128xf32>
    %43 = vector.extract_strided_slice %8 {offsets = [0, 0], sizes = [8, 128], strides = [1, 1]} : vector<24x128xf32> to vector<8x128xf32>
    %44 = vector.extract_strided_slice %42 {offsets = [0, 0], sizes = [8, 128], strides = [1, 1]} : vector<24x128xf32> to vector<8x128xf32>
    %45 = arith.addf %43, %44 : vector<8x128xf32>
    %46 = arith.negf %45 : vector<8x128xf32>
    %47 = math.exp %46 : vector<8x128xf32>
    %cst_11 = arith.constant 1.000000e+00 : f32
    %48 = vector.broadcast %cst_11 : f32 to vector<8x128xf32>
    %49 = arith.addf %48, %47 : vector<8x128xf32>
    %50 = arith.divf %48, %49 : vector<8x128xf32>
    %51 = vector.extract_strided_slice %8 {offsets = [8, 0], sizes = [8, 128], strides = [1, 1]} : vector<24x128xf32> to vector<8x128xf32>
    %52 = vector.extract_strided_slice %42 {offsets = [8, 0], sizes = [8, 128], strides = [1, 1]} : vector<24x128xf32> to vector<8x128xf32>
    %53 = arith.addf %51, %52 : vector<8x128xf32>
    %54 = arith.negf %53 : vector<8x128xf32>
    %55 = math.exp %54 : vector<8x128xf32>
    %cst_12 = arith.constant 1.000000e+00 : f32
    %56 = vector.broadcast %cst_12 : f32 to vector<8x128xf32>
    %57 = arith.addf %56, %55 : vector<8x128xf32>
    %58 = arith.divf %56, %57 : vector<8x128xf32>
    %59 = vector.extract_strided_slice %8 {offsets = [16, 0], sizes = [8, 128], strides = [1, 1]} : vector<24x128xf32> to vector<8x128xf32>
    %60 = vector.extract_strided_slice %42 {offsets = [16, 0], sizes = [8, 128], strides = [1, 1]} : vector<24x128xf32> to vector<8x128xf32>
    %61 = arith.mulf %50, %60 : vector<8x128xf32>
    %62 = arith.addf %59, %61 : vector<8x128xf32>
    %63 = math.tanh %62 : vector<8x128xf32>
    %cst_13 = arith.constant 1.000000e+00 : f32
    %64 = vector.broadcast %cst_13 : f32 to vector<8x128xf32>
    %65 = arith.subf %64, %58 : vector<8x128xf32>
    %66 = arith.mulf %65, %63 : vector<8x128xf32>
    %67 = arith.mulf %58, %5 : vector<8x128xf32>
    %68 = arith.addf %66, %67 : vector<8x128xf32>
    %c0_14 = arith.constant 0 : index
    %69 = arith.index_cast %c0_i32_7 : i32 to index
    %c0_15 = arith.constant 0 : index
    %c0_16 = arith.constant 0 : index
    %70 = vector.load %arg5[%c0_14, %69, %c0_15, %c0_16] : memref<1x8x8x128xf32, #tpu.memory_space<vmem>>, vector<1x1x8x128xf32>
    %71 = vector.shape_cast %70 : vector<1x1x8x128xf32> to vector<8x128xf32>
    %72 = vector.shape_cast %68 : vector<8x128xf32> to vector<1x1x8x128xf32>
    tpu.vector_store %arg5[%c0_14, %69, %c0_15, %c0_16], %72 {strides = array<i32>} : memref<1x8x8x128xf32, #tpu.memory_space<vmem>>, vector<1x1x8x128xf32>,
    %c1_i32_17 = arith.constant 1 : i32
    %c0_18 = arith.constant 0 : index
    %73 = arith.index_cast %c1_i32_17 : i32 to index
    %c0_19 = arith.constant 0 : index
    %c0_20 = arith.constant 0 : index
    %74 = vector.load %arg2[%c0_18, %73, %c0_19, %c0_20] : memref<1x8x24x128xf32, #tpu.memory_space<vmem>>, vector<1x1x24x128xf32>
    %75 = vector.shape_cast %74 : vector<1x1x24x128xf32> to vector<24x128xf32>
    %c9_i32_21 = arith.constant 9 : i32
    %76 = tpu.dynamic_rotate %68 by %c9_i32_21 dim 1 : vector<8x128xf32>, i32 -> vector<8x128xf32>
    %77 = vector.extract_strided_slice %4 {offsets = [0, 0, 0], sizes = [1, 8, 128], strides = [1, 1, 1]} : vector<9x8x128xf32> to vector<1x8x128xf32>
    %78 = vector.shape_cast %77 : vector<1x8x128xf32> to vector<8x128xf32>
    %79 = arith.mulf %76, %78 : vector<8x128xf32>
    %c8_i32_22 = arith.constant 8 : i32
    %80 = tpu.dynamic_rotate %68 by %c8_i32_22 dim 1 : vector<8x128xf32>, i32 -> vector<8x128xf32>
    %81 = vector.extract_strided_slice %4 {offsets = [1, 0, 0], sizes = [1, 8, 128], strides = [1, 1, 1]} : vector<9x8x128xf32> to vector<1x8x128xf32>
    %82 = vector.shape_cast %81 : vector<1x8x128xf32> to vector<8x128xf32>
    %83 = arith.mulf %80, %82 : vector<8x128xf32>
    %c7_i32_23 = arith.constant 7 : i32
    %84 = tpu.dynamic_rotate %68 by %c7_i32_23 dim 1 : vector<8x128xf32>, i32 -> vector<8x128xf32>
    %85 = vector.extract_strided_slice %4 {offsets = [2, 0, 0], sizes = [1, 8, 128], strides = [1, 1, 1]} : vector<9x8x128xf32> to vector<1x8x128xf32>
    %86 = vector.shape_cast %85 : vector<1x8x128xf32> to vector<8x128xf32>
    %87 = arith.mulf %84, %86 : vector<8x128xf32>
    %c1_i32_24 = arith.constant 1 : i32
    %88 = tpu.dynamic_rotate %68 by %c1_i32_24 dim 1 : vector<8x128xf32>, i32 -> vector<8x128xf32>
    %89 = vector.extract_strided_slice %4 {offsets = [3, 0, 0], sizes = [1, 8, 128], strides = [1, 1, 1]} : vector<9x8x128xf32> to vector<1x8x128xf32>
    %90 = vector.shape_cast %89 : vector<1x8x128xf32> to vector<8x128xf32>
    %91 = arith.mulf %88, %90 : vector<8x128xf32>
    %c127_i32_25 = arith.constant 127 : i32
    %92 = tpu.dynamic_rotate %68 by %c127_i32_25 dim 1 : vector<8x128xf32>, i32 -> vector<8x128xf32>
    %93 = vector.extract_strided_slice %4 {offsets = [5, 0, 0], sizes = [1, 8, 128], strides = [1, 1, 1]} : vector<9x8x128xf32> to vector<1x8x128xf32>
    %94 = vector.shape_cast %93 : vector<1x8x128xf32> to vector<8x128xf32>
    %95 = arith.mulf %92, %94 : vector<8x128xf32>
    %c121_i32_26 = arith.constant 121 : i32
    %96 = tpu.dynamic_rotate %68 by %c121_i32_26 dim 1 : vector<8x128xf32>, i32 -> vector<8x128xf32>
    %97 = vector.extract_strided_slice %4 {offsets = [6, 0, 0], sizes = [1, 8, 128], strides = [1, 1, 1]} : vector<9x8x128xf32> to vector<1x8x128xf32>
    %98 = vector.shape_cast %97 : vector<1x8x128xf32> to vector<8x128xf32>
    %99 = arith.mulf %96, %98 : vector<8x128xf32>
    %c120_i32_27 = arith.constant 120 : i32
    %100 = tpu.dynamic_rotate %68 by %c120_i32_27 dim 1 : vector<8x128xf32>, i32 -> vector<8x128xf32>
    %101 = vector.extract_strided_slice %4 {offsets = [7, 0, 0], sizes = [1, 8, 128], strides = [1, 1, 1]} : vector<9x8x128xf32> to vector<1x8x128xf32>
    %102 = vector.shape_cast %101 : vector<1x8x128xf32> to vector<8x128xf32>
    %103 = arith.mulf %100, %102 : vector<8x128xf32>
    %c119_i32_28 = arith.constant 119 : i32
    %104 = tpu.dynamic_rotate %68 by %c119_i32_28 dim 1 : vector<8x128xf32>, i32 -> vector<8x128xf32>
    %105 = vector.extract_strided_slice %4 {offsets = [8, 0, 0], sizes = [1, 8, 128], strides = [1, 1, 1]} : vector<9x8x128xf32> to vector<1x8x128xf32>
    %106 = vector.shape_cast %105 : vector<1x8x128xf32> to vector<8x128xf32>
    %107 = arith.mulf %104, %106 : vector<8x128xf32>
    %108 = tpu.concatenate %79, %83, %87, %91, %68, %95, %99, %103, %107 in 0 : vector<8x128xf32>, vector<8x128xf32>, vector<8x128xf32>, vector<8x128xf32>, vector<8x128xf32>, vector<8x128xf32>, vector<8x128xf32>, vector<8x128xf32>, vector<8x128xf32> -> vector<72x128xf32>
    %cst_29 = arith.constant dense<0.000000e+00> : vector<24x128xf32>
    %109 = tpu.matmul %3, %108, %cst_29 {dimension_numbers = #tpu.dot_dimension_numbers<[1], [0], [0], [1], [0, 0, 1, 1], [], []>} : vector<24x72xf32>, vector<72x128xf32>, vector<24x128xf32> -> vector<24x128xf32>
    %110 = vector.extract_strided_slice %75 {offsets = [0, 0], sizes = [8, 128], strides = [1, 1]} : vector<24x128xf32> to vector<8x128xf32>
    %111 = vector.extract_strided_slice %109 {offsets = [0, 0], sizes = [8, 128], strides = [1, 1]} : vector<24x128xf32> to vector<8x128xf32>
    %112 = arith.addf %110, %111 : vector<8x128xf32>
    %113 = arith.negf %112 : vector<8x128xf32>
    %114 = math.exp %113 : vector<8x128xf32>
    %cst_30 = arith.constant 1.000000e+00 : f32
    %115 = vector.broadcast %cst_30 : f32 to vector<8x128xf32>
    %116 = arith.addf %115, %114 : vector<8x128xf32>
    %117 = arith.divf %115, %116 : vector<8x128xf32>
    %118 = vector.extract_strided_slice %75 {offsets = [8, 0], sizes = [8, 128], strides = [1, 1]} : vector<24x128xf32> to vector<8x128xf32>
    %119 = vector.extract_strided_slice %109 {offsets = [8, 0], sizes = [8, 128], strides = [1, 1]} : vector<24x128xf32> to vector<8x128xf32>
    %120 = arith.addf %118, %119 : vector<8x128xf32>
    %121 = arith.negf %120 : vector<8x128xf32>
    %122 = math.exp %121 : vector<8x128xf32>
    %cst_31 = arith.constant 1.000000e+00 : f32
    %123 = vector.broadcast %cst_31 : f32 to vector<8x128xf32>
    %124 = arith.addf %123, %122 : vector<8x128xf32>
    %125 = arith.divf %123, %124 : vector<8x128xf32>
    %126 = vector.extract_strided_slice %75 {offsets = [16, 0], sizes = [8, 128], strides = [1, 1]} : vector<24x128xf32> to vector<8x128xf32>
    %127 = vector.extract_strided_slice %109 {offsets = [16, 0], sizes = [8, 128], strides = [1, 1]} : vector<24x128xf32> to vector<8x128xf32>
    %128 = arith.mulf %117, %127 : vector<8x128xf32>
    %129 = arith.addf %126, %128 : vector<8x128xf32>
    %130 = math.tanh %129 : vector<8x128xf32>
    %cst_32 = arith.constant 1.000000e+00 : f32
    %131 = vector.broadcast %cst_32 : f32 to vector<8x128xf32>
    %132 = arith.subf %131, %125 : vector<8x128xf32>
    %133 = arith.mulf %132, %130 : vector<8x128xf32>
    %134 = arith.mulf %125, %68 : vector<8x128xf32>
    %135 = arith.addf %133, %134 : vector<8x128xf32>
    %c0_33 = arith.constant 0 : index
    %136 = arith.index_cast %c1_i32_17 : i32 to index
    %c0_34 = arith.constant 0 : index
    %c0_35 = arith.constant 0 : index
    %137 = vector.load %arg5[%c0_33, %136, %c0_34, %c0_35] : memref<1x8x8x128xf32, #tpu.memory_space<vmem>>, vector<1x1x8x128xf32>
    %138 = vector.shape_cast %137 : vector<1x1x8x128xf32> to vector<8x128xf32>
    %139 = vector.shape_cast %135 : vector<8x128xf32> to vector<1x1x8x128xf32>
    tpu.vector_store %arg5[%c0_33, %136, %c0_34, %c0_35], %139 {strides = array<i32>} : memref<1x8x8x128xf32, #tpu.memory_space<vmem>>, vector<1x1x8x128xf32>,
    %c2_i32 = arith.constant 2 : i32
    %c0_36 = arith.constant 0 : index
    %140 = arith.index_cast %c2_i32 : i32 to index
    %c0_37 = arith.constant 0 : index
    %c0_38 = arith.constant 0 : index
    %141 = vector.load %arg2[%c0_36, %140, %c0_37, %c0_38] : memref<1x8x24x128xf32, #tpu.memory_space<vmem>>, vector<1x1x24x128xf32>
    %142 = vector.shape_cast %141 : vector<1x1x24x128xf32> to vector<24x128xf32>
    %c9_i32_39 = arith.constant 9 : i32
    %143 = tpu.dynamic_rotate %135 by %c9_i32_39 dim 1 : vector<8x128xf32>, i32 -> vector<8x128xf32>
    %144 = vector.extract_strided_slice %4 {offsets = [0, 0, 0], sizes = [1, 8, 128], strides = [1, 1, 1]} : vector<9x8x128xf32> to vector<1x8x128xf32>
    %145 = vector.shape_cast %144 : vector<1x8x128xf32> to vector<8x128xf32>
    %146 = arith.mulf %143, %145 : vector<8x128xf32>
    %c8_i32_40 = arith.constant 8 : i32
    %147 = tpu.dynamic_rotate %135 by %c8_i32_40 dim 1 : vector<8x128xf32>, i32 -> vector<8x128xf32>
    %148 = vector.extract_strided_slice %4 {offsets = [1, 0, 0], sizes = [1, 8, 128], strides = [1, 1, 1]} : vector<9x8x128xf32> to vector<1x8x128xf32>
    %149 = vector.shape_cast %148 : vector<1x8x128xf32> to vector<8x128xf32>
    %150 = arith.mulf %147, %149 : vector<8x128xf32>
    %c7_i32_41 = arith.constant 7 : i32
    %151 = tpu.dynamic_rotate %135 by %c7_i32_41 dim 1 : vector<8x128xf32>, i32 -> vector<8x128xf32>
    %152 = vector.extract_strided_slice %4 {offsets = [2, 0, 0], sizes = [1, 8, 128], strides = [1, 1, 1]} : vector<9x8x128xf32> to vector<1x8x128xf32>
    %153 = vector.shape_cast %152 : vector<1x8x128xf32> to vector<8x128xf32>
    %154 = arith.mulf %151, %153 : vector<8x128xf32>
    %c1_i32_42 = arith.constant 1 : i32
    %155 = tpu.dynamic_rotate %135 by %c1_i32_42 dim 1 : vector<8x128xf32>, i32 -> vector<8x128xf32>
    %156 = vector.extract_strided_slice %4 {offsets = [3, 0, 0], sizes = [1, 8, 128], strides = [1, 1, 1]} : vector<9x8x128xf32> to vector<1x8x128xf32>
    %157 = vector.shape_cast %156 : vector<1x8x128xf32> to vector<8x128xf32>
    %158 = arith.mulf %155, %157 : vector<8x128xf32>
    %c127_i32_43 = arith.constant 127 : i32
    %159 = tpu.dynamic_rotate %135 by %c127_i32_43 dim 1 : vector<8x128xf32>, i32 -> vector<8x128xf32>
    %160 = vector.extract_strided_slice %4 {offsets = [5, 0, 0], sizes = [1, 8, 128], strides = [1, 1, 1]} : vector<9x8x128xf32> to vector<1x8x128xf32>
    %161 = vector.shape_cast %160 : vector<1x8x128xf32> to vector<8x128xf32>
    %162 = arith.mulf %159, %161 : vector<8x128xf32>
    %c121_i32_44 = arith.constant 121 : i32
    %163 = tpu.dynamic_rotate %135 by %c121_i32_44 dim 1 : vector<8x128xf32>, i32 -> vector<8x128xf32>
    %164 = vector.extract_strided_slice %4 {offsets = [6, 0, 0], sizes = [1, 8, 128], strides = [1, 1, 1]} : vector<9x8x128xf32> to vector<1x8x128xf32>
    %165 = vector.shape_cast %164 : vector<1x8x128xf32> to vector<8x128xf32>
    %166 = arith.mulf %163, %165 : vector<8x128xf32>
    %c120_i32_45 = arith.constant 120 : i32
    %167 = tpu.dynamic_rotate %135 by %c120_i32_45 dim 1 : vector<8x128xf32>, i32 -> vector<8x128xf32>
    %168 = vector.extract_strided_slice %4 {offsets = [7, 0, 0], sizes = [1, 8, 128], strides = [1, 1, 1]} : vector<9x8x128xf32> to vector<1x8x128xf32>
    %169 = vector.shape_cast %168 : vector<1x8x128xf32> to vector<8x128xf32>
    %170 = arith.mulf %167, %169 : vector<8x128xf32>
    %c119_i32_46 = arith.constant 119 : i32
    %171 = tpu.dynamic_rotate %135 by %c119_i32_46 dim 1 : vector<8x128xf32>, i32 -> vector<8x128xf32>
    %172 = vector.extract_strided_slice %4 {offsets = [8, 0, 0], sizes = [1, 8, 128], strides = [1, 1, 1]} : vector<9x8x128xf32> to vector<1x8x128xf32>
    %173 = vector.shape_cast %172 : vector<1x8x128xf32> to vector<8x128xf32>
    %174 = arith.mulf %171, %173 : vector<8x128xf32>
    %175 = tpu.concatenate %146, %150, %154, %158, %135, %162, %166, %170, %174 in 0 : vector<8x128xf32>, vector<8x128xf32>, vector<8x128xf32>, vector<8x128xf32>, vector<8x128xf32>, vector<8x128xf32>, vector<8x128xf32>, vector<8x128xf32>, vector<8x128xf32> -> vector<72x128xf32>
    %cst_47 = arith.constant dense<0.000000e+00> : vector<24x128xf32>
    %176 = tpu.matmul %3, %175, %cst_47 {dimension_numbers = #tpu.dot_dimension_numbers<[1], [0], [0], [1], [0, 0, 1, 1], [], []>} : vector<24x72xf32>, vector<72x128xf32>, vector<24x128xf32> -> vector<24x128xf32>
    %177 = vector.extract_strided_slice %142 {offsets = [0, 0], sizes = [8, 128], strides = [1, 1]} : vector<24x128xf32> to vector<8x128xf32>
    %178 = vector.extract_strided_slice %176 {offsets = [0, 0], sizes = [8, 128], strides = [1, 1]} : vector<24x128xf32> to vector<8x128xf32>
    %179 = arith.addf %177, %178 : vector<8x128xf32>
    %180 = arith.negf %179 : vector<8x128xf32>
    %181 = math.exp %180 : vector<8x128xf32>
    %cst_48 = arith.constant 1.000000e+00 : f32
    %182 = vector.broadcast %cst_48 : f32 to vector<8x128xf32>
    %183 = arith.addf %182, %181 : vector<8x128xf32>
    %184 = arith.divf %182, %183 : vector<8x128xf32>
    %185 = vector.extract_strided_slice %142 {offsets = [8, 0], sizes = [8, 128], strides = [1, 1]} : vector<24x128xf32> to vector<8x128xf32>
    %186 = vector.extract_strided_slice %176 {offsets = [8, 0], sizes = [8, 128], strides = [1, 1]} : vector<24x128xf32> to vector<8x128xf32>
    %187 = arith.addf %185, %186 : vector<8x128xf32>
    %188 = arith.negf %187 : vector<8x128xf32>
    %189 = math.exp %188 : vector<8x128xf32>
    %cst_49 = arith.constant 1.000000e+00 : f32
    %190 = vector.broadcast %cst_49 : f32 to vector<8x128xf32>
    %191 = arith.addf %190, %189 : vector<8x128xf32>
    %192 = arith.divf %190, %191 : vector<8x128xf32>
    %193 = vector.extract_strided_slice %142 {offsets = [16, 0], sizes = [8, 128], strides = [1, 1]} : vector<24x128xf32> to vector<8x128xf32>
    %194 = vector.extract_strided_slice %176 {offsets = [16, 0], sizes = [8, 128], strides = [1, 1]} : vector<24x128xf32> to vector<8x128xf32>
    %195 = arith.mulf %184, %194 : vector<8x128xf32>
    %196 = arith.addf %193, %195 : vector<8x128xf32>
    %197 = math.tanh %196 : vector<8x128xf32>
    %cst_50 = arith.constant 1.000000e+00 : f32
    %198 = vector.broadcast %cst_50 : f32 to vector<8x128xf32>
    %199 = arith.subf %198, %192 : vector<8x128xf32>
    %200 = arith.mulf %199, %197 : vector<8x128xf32>
    %201 = arith.mulf %192, %135 : vector<8x128xf32>
    %202 = arith.addf %200, %201 : vector<8x128xf32>
    %c0_51 = arith.constant 0 : index
    %203 = arith.index_cast %c2_i32 : i32 to index
    %c0_52 = arith.constant 0 : index
    %c0_53 = arith.constant 0 : index
    %204 = vector.load %arg5[%c0_51, %203, %c0_52, %c0_53] : memref<1x8x8x128xf32, #tpu.memory_space<vmem>>, vector<1x1x8x128xf32>
    %205 = vector.shape_cast %204 : vector<1x1x8x128xf32> to vector<8x128xf32>
    %206 = vector.shape_cast %202 : vector<8x128xf32> to vector<1x1x8x128xf32>
    tpu.vector_store %arg5[%c0_51, %203, %c0_52, %c0_53], %206 {strides = array<i32>} : memref<1x8x8x128xf32, #tpu.memory_space<vmem>>, vector<1x1x8x128xf32>,
    %c3_i32 = arith.constant 3 : i32
    %c0_54 = arith.constant 0 : index
    %207 = arith.index_cast %c3_i32 : i32 to index
    %c0_55 = arith.constant 0 : index
    %c0_56 = arith.constant 0 : index
    %208 = vector.load %arg2[%c0_54, %207, %c0_55, %c0_56] : memref<1x8x24x128xf32, #tpu.memory_space<vmem>>, vector<1x1x24x128xf32>
    %209 = vector.shape_cast %208 : vector<1x1x24x128xf32> to vector<24x128xf32>
    %c9_i32_57 = arith.constant 9 : i32
    %210 = tpu.dynamic_rotate %202 by %c9_i32_57 dim 1 : vector<8x128xf32>, i32 -> vector<8x128xf32>
    %211 = vector.extract_strided_slice %4 {offsets = [0, 0, 0], sizes = [1, 8, 128], strides = [1, 1, 1]} : vector<9x8x128xf32> to vector<1x8x128xf32>
    %212 = vector.shape_cast %211 : vector<1x8x128xf32> to vector<8x128xf32>
    %213 = arith.mulf %210, %212 : vector<8x128xf32>
    %c8_i32_58 = arith.constant 8 : i32
    %214 = tpu.dynamic_rotate %202 by %c8_i32_58 dim 1 : vector<8x128xf32>, i32 -> vector<8x128xf32>
    %215 = vector.extract_strided_slice %4 {offsets = [1, 0, 0], sizes = [1, 8, 128], strides = [1, 1, 1]} : vector<9x8x128xf32> to vector<1x8x128xf32>
    %216 = vector.shape_cast %215 : vector<1x8x128xf32> to vector<8x128xf32>
    %217 = arith.mulf %214, %216 : vector<8x128xf32>
    %c7_i32_59 = arith.constant 7 : i32
    %218 = tpu.dynamic_rotate %202 by %c7_i32_59 dim 1 : vector<8x128xf32>, i32 -> vector<8x128xf32>
    %219 = vector.extract_strided_slice %4 {offsets = [2, 0, 0], sizes = [1, 8, 128], strides = [1, 1, 1]} : vector<9x8x128xf32> to vector<1x8x128xf32>
    %220 = vector.shape_cast %219 : vector<1x8x128xf32> to vector<8x128xf32>
    %221 = arith.mulf %218, %220 : vector<8x128xf32>
    %c1_i32_60 = arith.constant 1 : i32
    %222 = tpu.dynamic_rotate %202 by %c1_i32_60 dim 1 : vector<8x128xf32>, i32 -> vector<8x128xf32>
    %223 = vector.extract_strided_slice %4 {offsets = [3, 0, 0], sizes = [1, 8, 128], strides = [1, 1, 1]} : vector<9x8x128xf32> to vector<1x8x128xf32>
    %224 = vector.shape_cast %223 : vector<1x8x128xf32> to vector<8x128xf32>
    %225 = arith.mulf %222, %224 : vector<8x128xf32>
    %c127_i32_61 = arith.constant 127 : i32
    %226 = tpu.dynamic_rotate %202 by %c127_i32_61 dim 1 : vector<8x128xf32>, i32 -> vector<8x128xf32>
    %227 = vector.extract_strided_slice %4 {offsets = [5, 0, 0], sizes = [1, 8, 128], strides = [1, 1, 1]} : vector<9x8x128xf32> to vector<1x8x128xf32>
    %228 = vector.shape_cast %227 : vector<1x8x128xf32> to vector<8x128xf32>
    %229 = arith.mulf %226, %228 : vector<8x128xf32>
    %c121_i32_62 = arith.constant 121 : i32
    %230 = tpu.dynamic_rotate %202 by %c121_i32_62 dim 1 : vector<8x128xf32>, i32 -> vector<8x128xf32>
    %231 = vector.extract_strided_slice %4 {offsets = [6, 0, 0], sizes = [1, 8, 128], strides = [1, 1, 1]} : vector<9x8x128xf32> to vector<1x8x128xf32>
    %232 = vector.shape_cast %231 : vector<1x8x128xf32> to vector<8x128xf32>
    %233 = arith.mulf %230, %232 : vector<8x128xf32>
    %c120_i32_63 = arith.constant 120 : i32
    %234 = tpu.dynamic_rotate %202 by %c120_i32_63 dim 1 : vector<8x128xf32>, i32 -> vector<8x128xf32>
    %235 = vector.extract_strided_slice %4 {offsets = [7, 0, 0], sizes = [1, 8, 128], strides = [1, 1, 1]} : vector<9x8x128xf32> to vector<1x8x128xf32>
    %236 = vector.shape_cast %235 : vector<1x8x128xf32> to vector<8x128xf32>
    %237 = arith.mulf %234, %236 : vector<8x128xf32>
    %c119_i32_64 = arith.constant 119 : i32
    %238 = tpu.dynamic_rotate %202 by %c119_i32_64 dim 1 : vector<8x128xf32>, i32 -> vector<8x128xf32>
    %239 = vector.extract_strided_slice %4 {offsets = [8, 0, 0], sizes = [1, 8, 128], strides = [1, 1, 1]} : vector<9x8x128xf32> to vector<1x8x128xf32>
    %240 = vector.shape_cast %239 : vector<1x8x128xf32> to vector<8x128xf32>
    %241 = arith.mulf %238, %240 : vector<8x128xf32>
    %242 = tpu.concatenate %213, %217, %221, %225, %202, %229, %233, %237, %241 in 0 : vector<8x128xf32>, vector<8x128xf32>, vector<8x128xf32>, vector<8x128xf32>, vector<8x128xf32>, vector<8x128xf32>, vector<8x128xf32>, vector<8x128xf32>, vector<8x128xf32> -> vector<72x128xf32>
    %cst_65 = arith.constant dense<0.000000e+00> : vector<24x128xf32>
    %243 = tpu.matmul %3, %242, %cst_65 {dimension_numbers = #tpu.dot_dimension_numbers<[1], [0], [0], [1], [0, 0, 1, 1], [], []>} : vector<24x72xf32>, vector<72x128xf32>, vector<24x128xf32> -> vector<24x128xf32>
    %244 = vector.extract_strided_slice %209 {offsets = [0, 0], sizes = [8, 128], strides = [1, 1]} : vector<24x128xf32> to vector<8x128xf32>
    %245 = vector.extract_strided_slice %243 {offsets = [0, 0], sizes = [8, 128], strides = [1, 1]} : vector<24x128xf32> to vector<8x128xf32>
    %246 = arith.addf %244, %245 : vector<8x128xf32>
    %247 = arith.negf %246 : vector<8x128xf32>
    %248 = math.exp %247 : vector<8x128xf32>
    %cst_66 = arith.constant 1.000000e+00 : f32
    %249 = vector.broadcast %cst_66 : f32 to vector<8x128xf32>
    %250 = arith.addf %249, %248 : vector<8x128xf32>
    %251 = arith.divf %249, %250 : vector<8x128xf32>
    %252 = vector.extract_strided_slice %209 {offsets = [8, 0], sizes = [8, 128], strides = [1, 1]} : vector<24x128xf32> to vector<8x128xf32>
    %253 = vector.extract_strided_slice %243 {offsets = [8, 0], sizes = [8, 128], strides = [1, 1]} : vector<24x128xf32> to vector<8x128xf32>
    %254 = arith.addf %252, %253 : vector<8x128xf32>
    %255 = arith.negf %254 : vector<8x128xf32>
    %256 = math.exp %255 : vector<8x128xf32>
    %cst_67 = arith.constant 1.000000e+00 : f32
    %257 = vector.broadcast %cst_67 : f32 to vector<8x128xf32>
    %258 = arith.addf %257, %256 : vector<8x128xf32>
    %259 = arith.divf %257, %258 : vector<8x128xf32>
    %260 = vector.extract_strided_slice %209 {offsets = [16, 0], sizes = [8, 128], strides = [1, 1]} : vector<24x128xf32> to vector<8x128xf32>
    %261 = vector.extract_strided_slice %243 {offsets = [16, 0], sizes = [8, 128], strides = [1, 1]} : vector<24x128xf32> to vector<8x128xf32>
    %262 = arith.mulf %251, %261 : vector<8x128xf32>
    %263 = arith.addf %260, %262 : vector<8x128xf32>
    %264 = math.tanh %263 : vector<8x128xf32>
    %cst_68 = arith.constant 1.000000e+00 : f32
    %265 = vector.broadcast %cst_68 : f32 to vector<8x128xf32>
    %266 = arith.subf %265, %259 : vector<8x128xf32>
    %267 = arith.mulf %266, %264 : vector<8x128xf32>
    %268 = arith.mulf %259, %202 : vector<8x128xf32>
    %269 = arith.addf %267, %268 : vector<8x128xf32>
    %c0_69 = arith.constant 0 : index
    %270 = arith.index_cast %c3_i32 : i32 to index
    %c0_70 = arith.constant 0 : index
    %c0_71 = arith.constant 0 : index
    %271 = vector.load %arg5[%c0_69, %270, %c0_70, %c0_71] : memref<1x8x8x128xf32, #tpu.memory_space<vmem>>, vector<1x1x8x128xf32>
    %272 = vector.shape_cast %271 : vector<1x1x8x128xf32> to vector<8x128xf32>
    %273 = vector.shape_cast %269 : vector<8x128xf32> to vector<1x1x8x128xf32>
    tpu.vector_store %arg5[%c0_69, %270, %c0_70, %c0_71], %273 {strides = array<i32>} : memref<1x8x8x128xf32, #tpu.memory_space<vmem>>, vector<1x1x8x128xf32>,
    %c4_i32 = arith.constant 4 : i32
    %c0_72 = arith.constant 0 : index
    %274 = arith.index_cast %c4_i32 : i32 to index
    %c0_73 = arith.constant 0 : index
    %c0_74 = arith.constant 0 : index
    %275 = vector.load %arg2[%c0_72, %274, %c0_73, %c0_74] : memref<1x8x24x128xf32, #tpu.memory_space<vmem>>, vector<1x1x24x128xf32>
    %276 = vector.shape_cast %275 : vector<1x1x24x128xf32> to vector<24x128xf32>
    %c9_i32_75 = arith.constant 9 : i32
    %277 = tpu.dynamic_rotate %269 by %c9_i32_75 dim 1 : vector<8x128xf32>, i32 -> vector<8x128xf32>
    %278 = vector.extract_strided_slice %4 {offsets = [0, 0, 0], sizes = [1, 8, 128], strides = [1, 1, 1]} : vector<9x8x128xf32> to vector<1x8x128xf32>
    %279 = vector.shape_cast %278 : vector<1x8x128xf32> to vector<8x128xf32>
    %280 = arith.mulf %277, %279 : vector<8x128xf32>
    %c8_i32_76 = arith.constant 8 : i32
    %281 = tpu.dynamic_rotate %269 by %c8_i32_76 dim 1 : vector<8x128xf32>, i32 -> vector<8x128xf32>
    %282 = vector.extract_strided_slice %4 {offsets = [1, 0, 0], sizes = [1, 8, 128], strides = [1, 1, 1]} : vector<9x8x128xf32> to vector<1x8x128xf32>
    %283 = vector.shape_cast %282 : vector<1x8x128xf32> to vector<8x128xf32>
    %284 = arith.mulf %281, %283 : vector<8x128xf32>
    %c7_i32_77 = arith.constant 7 : i32
    %285 = tpu.dynamic_rotate %269 by %c7_i32_77 dim 1 : vector<8x128xf32>, i32 -> vector<8x128xf32>
    %286 = vector.extract_strided_slice %4 {offsets = [2, 0, 0], sizes = [1, 8, 128], strides = [1, 1, 1]} : vector<9x8x128xf32> to vector<1x8x128xf32>
    %287 = vector.shape_cast %286 : vector<1x8x128xf32> to vector<8x128xf32>
    %288 = arith.mulf %285, %287 : vector<8x128xf32>
    %c1_i32_78 = arith.constant 1 : i32
    %289 = tpu.dynamic_rotate %269 by %c1_i32_78 dim 1 : vector<8x128xf32>, i32 -> vector<8x128xf32>
    %290 = vector.extract_strided_slice %4 {offsets = [3, 0, 0], sizes = [1, 8, 128], strides = [1, 1, 1]} : vector<9x8x128xf32> to vector<1x8x128xf32>
    %291 = vector.shape_cast %290 : vector<1x8x128xf32> to vector<8x128xf32>
    %292 = arith.mulf %289, %291 : vector<8x128xf32>
    %c127_i32_79 = arith.constant 127 : i32
    %293 = tpu.dynamic_rotate %269 by %c127_i32_79 dim 1 : vector<8x128xf32>, i32 -> vector<8x128xf32>
    %294 = vector.extract_strided_slice %4 {offsets = [5, 0, 0], sizes = [1, 8, 128], strides = [1, 1, 1]} : vector<9x8x128xf32> to vector<1x8x128xf32>
    %295 = vector.shape_cast %294 : vector<1x8x128xf32> to vector<8x128xf32>
    %296 = arith.mulf %293, %295 : vector<8x128xf32>
    %c121_i32_80 = arith.constant 121 : i32
    %297 = tpu.dynamic_rotate %269 by %c121_i32_80 dim 1 : vector<8x128xf32>, i32 -> vector<8x128xf32>
    %298 = vector.extract_strided_slice %4 {offsets = [6, 0, 0], sizes = [1, 8, 128], strides = [1, 1, 1]} : vector<9x8x128xf32> to vector<1x8x128xf32>
    %299 = vector.shape_cast %298 : vector<1x8x128xf32> to vector<8x128xf32>
    %300 = arith.mulf %297, %299 : vector<8x128xf32>
    %c120_i32_81 = arith.constant 120 : i32
    %301 = tpu.dynamic_rotate %269 by %c120_i32_81 dim 1 : vector<8x128xf32>, i32 -> vector<8x128xf32>
    %302 = vector.extract_strided_slice %4 {offsets = [7, 0, 0], sizes = [1, 8, 128], strides = [1, 1, 1]} : vector<9x8x128xf32> to vector<1x8x128xf32>
    %303 = vector.shape_cast %302 : vector<1x8x128xf32> to vector<8x128xf32>
    %304 = arith.mulf %301, %303 : vector<8x128xf32>
    %c119_i32_82 = arith.constant 119 : i32
    %305 = tpu.dynamic_rotate %269 by %c119_i32_82 dim 1 : vector<8x128xf32>, i32 -> vector<8x128xf32>
    %306 = vector.extract_strided_slice %4 {offsets = [8, 0, 0], sizes = [1, 8, 128], strides = [1, 1, 1]} : vector<9x8x128xf32> to vector<1x8x128xf32>
    %307 = vector.shape_cast %306 : vector<1x8x128xf32> to vector<8x128xf32>
    %308 = arith.mulf %305, %307 : vector<8x128xf32>
    %309 = tpu.concatenate %280, %284, %288, %292, %269, %296, %300, %304, %308 in 0 : vector<8x128xf32>, vector<8x128xf32>, vector<8x128xf32>, vector<8x128xf32>, vector<8x128xf32>, vector<8x128xf32>, vector<8x128xf32>, vector<8x128xf32>, vector<8x128xf32> -> vector<72x128xf32>
    %cst_83 = arith.constant dense<0.000000e+00> : vector<24x128xf32>
    %310 = tpu.matmul %3, %309, %cst_83 {dimension_numbers = #tpu.dot_dimension_numbers<[1], [0], [0], [1], [0, 0, 1, 1], [], []>} : vector<24x72xf32>, vector<72x128xf32>, vector<24x128xf32> -> vector<24x128xf32>
    %311 = vector.extract_strided_slice %276 {offsets = [0, 0], sizes = [8, 128], strides = [1, 1]} : vector<24x128xf32> to vector<8x128xf32>
    %312 = vector.extract_strided_slice %310 {offsets = [0, 0], sizes = [8, 128], strides = [1, 1]} : vector<24x128xf32> to vector<8x128xf32>
    %313 = arith.addf %311, %312 : vector<8x128xf32>
    %314 = arith.negf %313 : vector<8x128xf32>
    %315 = math.exp %314 : vector<8x128xf32>
    %cst_84 = arith.constant 1.000000e+00 : f32
    %316 = vector.broadcast %cst_84 : f32 to vector<8x128xf32>
    %317 = arith.addf %316, %315 : vector<8x128xf32>
    %318 = arith.divf %316, %317 : vector<8x128xf32>
    %319 = vector.extract_strided_slice %276 {offsets = [8, 0], sizes = [8, 128], strides = [1, 1]} : vector<24x128xf32> to vector<8x128xf32>
    %320 = vector.extract_strided_slice %310 {offsets = [8, 0], sizes = [8, 128], strides = [1, 1]} : vector<24x128xf32> to vector<8x128xf32>
    %321 = arith.addf %319, %320 : vector<8x128xf32>
    %322 = arith.negf %321 : vector<8x128xf32>
    %323 = math.exp %322 : vector<8x128xf32>
    %cst_85 = arith.constant 1.000000e+00 : f32
    %324 = vector.broadcast %cst_85 : f32 to vector<8x128xf32>
    %325 = arith.addf %324, %323 : vector<8x128xf32>
    %326 = arith.divf %324, %325 : vector<8x128xf32>
    %327 = vector.extract_strided_slice %276 {offsets = [16, 0], sizes = [8, 128], strides = [1, 1]} : vector<24x128xf32> to vector<8x128xf32>
    %328 = vector.extract_strided_slice %310 {offsets = [16, 0], sizes = [8, 128], strides = [1, 1]} : vector<24x128xf32> to vector<8x128xf32>
    %329 = arith.mulf %318, %328 : vector<8x128xf32>
    %330 = arith.addf %327, %329 : vector<8x128xf32>
    %331 = math.tanh %330 : vector<8x128xf32>
    %cst_86 = arith.constant 1.000000e+00 : f32
    %332 = vector.broadcast %cst_86 : f32 to vector<8x128xf32>
    %333 = arith.subf %332, %326 : vector<8x128xf32>
    %334 = arith.mulf %333, %331 : vector<8x128xf32>
    %335 = arith.mulf %326, %269 : vector<8x128xf32>
    %336 = arith.addf %334, %335 : vector<8x128xf32>
    %c0_87 = arith.constant 0 : index
    %337 = arith.index_cast %c4_i32 : i32 to index
    %c0_88 = arith.constant 0 : index
    %c0_89 = arith.constant 0 : index
    %338 = vector.load %arg5[%c0_87, %337, %c0_88, %c0_89] : memref<1x8x8x128xf32, #tpu.memory_space<vmem>>, vector<1x1x8x128xf32>
    %339 = vector.shape_cast %338 : vector<1x1x8x128xf32> to vector<8x128xf32>
    %340 = vector.shape_cast %336 : vector<8x128xf32> to vector<1x1x8x128xf32>
    tpu.vector_store %arg5[%c0_87, %337, %c0_88, %c0_89], %340 {strides = array<i32>} : memref<1x8x8x128xf32, #tpu.memory_space<vmem>>, vector<1x1x8x128xf32>,
    %c5_i32 = arith.constant 5 : i32
    %c0_90 = arith.constant 0 : index
    %341 = arith.index_cast %c5_i32 : i32 to index
    %c0_91 = arith.constant 0 : index
    %c0_92 = arith.constant 0 : index
    %342 = vector.load %arg2[%c0_90, %341, %c0_91, %c0_92] : memref<1x8x24x128xf32, #tpu.memory_space<vmem>>, vector<1x1x24x128xf32>
    %343 = vector.shape_cast %342 : vector<1x1x24x128xf32> to vector<24x128xf32>
    %c9_i32_93 = arith.constant 9 : i32
    %344 = tpu.dynamic_rotate %336 by %c9_i32_93 dim 1 : vector<8x128xf32>, i32 -> vector<8x128xf32>
    %345 = vector.extract_strided_slice %4 {offsets = [0, 0, 0], sizes = [1, 8, 128], strides = [1, 1, 1]} : vector<9x8x128xf32> to vector<1x8x128xf32>
    %346 = vector.shape_cast %345 : vector<1x8x128xf32> to vector<8x128xf32>
    %347 = arith.mulf %344, %346 : vector<8x128xf32>
    %c8_i32_94 = arith.constant 8 : i32
    %348 = tpu.dynamic_rotate %336 by %c8_i32_94 dim 1 : vector<8x128xf32>, i32 -> vector<8x128xf32>
    %349 = vector.extract_strided_slice %4 {offsets = [1, 0, 0], sizes = [1, 8, 128], strides = [1, 1, 1]} : vector<9x8x128xf32> to vector<1x8x128xf32>
    %350 = vector.shape_cast %349 : vector<1x8x128xf32> to vector<8x128xf32>
    %351 = arith.mulf %348, %350 : vector<8x128xf32>
    %c7_i32_95 = arith.constant 7 : i32
    %352 = tpu.dynamic_rotate %336 by %c7_i32_95 dim 1 : vector<8x128xf32>, i32 -> vector<8x128xf32>
    %353 = vector.extract_strided_slice %4 {offsets = [2, 0, 0], sizes = [1, 8, 128], strides = [1, 1, 1]} : vector<9x8x128xf32> to vector<1x8x128xf32>
    %354 = vector.shape_cast %353 : vector<1x8x128xf32> to vector<8x128xf32>
    %355 = arith.mulf %352, %354 : vector<8x128xf32>
    %c1_i32_96 = arith.constant 1 : i32
    %356 = tpu.dynamic_rotate %336 by %c1_i32_96 dim 1 : vector<8x128xf32>, i32 -> vector<8x128xf32>
    %357 = vector.extract_strided_slice %4 {offsets = [3, 0, 0], sizes = [1, 8, 128], strides = [1, 1, 1]} : vector<9x8x128xf32> to vector<1x8x128xf32>
    %358 = vector.shape_cast %357 : vector<1x8x128xf32> to vector<8x128xf32>
    %359 = arith.mulf %356, %358 : vector<8x128xf32>
    %c127_i32_97 = arith.constant 127 : i32
    %360 = tpu.dynamic_rotate %336 by %c127_i32_97 dim 1 : vector<8x128xf32>, i32 -> vector<8x128xf32>
    %361 = vector.extract_strided_slice %4 {offsets = [5, 0, 0], sizes = [1, 8, 128], strides = [1, 1, 1]} : vector<9x8x128xf32> to vector<1x8x128xf32>
    %362 = vector.shape_cast %361 : vector<1x8x128xf32> to vector<8x128xf32>
    %363 = arith.mulf %360, %362 : vector<8x128xf32>
    %c121_i32_98 = arith.constant 121 : i32
    %364 = tpu.dynamic_rotate %336 by %c121_i32_98 dim 1 : vector<8x128xf32>, i32 -> vector<8x128xf32>
    %365 = vector.extract_strided_slice %4 {offsets = [6, 0, 0], sizes = [1, 8, 128], strides = [1, 1, 1]} : vector<9x8x128xf32> to vector<1x8x128xf32>
    %366 = vector.shape_cast %365 : vector<1x8x128xf32> to vector<8x128xf32>
    %367 = arith.mulf %364, %366 : vector<8x128xf32>
    %c120_i32_99 = arith.constant 120 : i32
    %368 = tpu.dynamic_rotate %336 by %c120_i32_99 dim 1 : vector<8x128xf32>, i32 -> vector<8x128xf32>
    %369 = vector.extract_strided_slice %4 {offsets = [7, 0, 0], sizes = [1, 8, 128], strides = [1, 1, 1]} : vector<9x8x128xf32> to vector<1x8x128xf32>
    %370 = vector.shape_cast %369 : vector<1x8x128xf32> to vector<8x128xf32>
    %371 = arith.mulf %368, %370 : vector<8x128xf32>
    %c119_i32_100 = arith.constant 119 : i32
    %372 = tpu.dynamic_rotate %336 by %c119_i32_100 dim 1 : vector<8x128xf32>, i32 -> vector<8x128xf32>
    %373 = vector.extract_strided_slice %4 {offsets = [8, 0, 0], sizes = [1, 8, 128], strides = [1, 1, 1]} : vector<9x8x128xf32> to vector<1x8x128xf32>
    %374 = vector.shape_cast %373 : vector<1x8x128xf32> to vector<8x128xf32>
    %375 = arith.mulf %372, %374 : vector<8x128xf32>
    %376 = tpu.concatenate %347, %351, %355, %359, %336, %363, %367, %371, %375 in 0 : vector<8x128xf32>, vector<8x128xf32>, vector<8x128xf32>, vector<8x128xf32>, vector<8x128xf32>, vector<8x128xf32>, vector<8x128xf32>, vector<8x128xf32>, vector<8x128xf32> -> vector<72x128xf32>
    %cst_101 = arith.constant dense<0.000000e+00> : vector<24x128xf32>
    %377 = tpu.matmul %3, %376, %cst_101 {dimension_numbers = #tpu.dot_dimension_numbers<[1], [0], [0], [1], [0, 0, 1, 1], [], []>} : vector<24x72xf32>, vector<72x128xf32>, vector<24x128xf32> -> vector<24x128xf32>
    %378 = vector.extract_strided_slice %343 {offsets = [0, 0], sizes = [8, 128], strides = [1, 1]} : vector<24x128xf32> to vector<8x128xf32>
    %379 = vector.extract_strided_slice %377 {offsets = [0, 0], sizes = [8, 128], strides = [1, 1]} : vector<24x128xf32> to vector<8x128xf32>
    %380 = arith.addf %378, %379 : vector<8x128xf32>
    %381 = arith.negf %380 : vector<8x128xf32>
    %382 = math.exp %381 : vector<8x128xf32>
    %cst_102 = arith.constant 1.000000e+00 : f32
    %383 = vector.broadcast %cst_102 : f32 to vector<8x128xf32>
    %384 = arith.addf %383, %382 : vector<8x128xf32>
    %385 = arith.divf %383, %384 : vector<8x128xf32>
    %386 = vector.extract_strided_slice %343 {offsets = [8, 0], sizes = [8, 128], strides = [1, 1]} : vector<24x128xf32> to vector<8x128xf32>
    %387 = vector.extract_strided_slice %377 {offsets = [8, 0], sizes = [8, 128], strides = [1, 1]} : vector<24x128xf32> to vector<8x128xf32>
    %388 = arith.addf %386, %387 : vector<8x128xf32>
    %389 = arith.negf %388 : vector<8x128xf32>
    %390 = math.exp %389 : vector<8x128xf32>
    %cst_103 = arith.constant 1.000000e+00 : f32
    %391 = vector.broadcast %cst_103 : f32 to vector<8x128xf32>
    %392 = arith.addf %391, %390 : vector<8x128xf32>
    %393 = arith.divf %391, %392 : vector<8x128xf32>
    %394 = vector.extract_strided_slice %343 {offsets = [16, 0], sizes = [8, 128], strides = [1, 1]} : vector<24x128xf32> to vector<8x128xf32>
    %395 = vector.extract_strided_slice %377 {offsets = [16, 0], sizes = [8, 128], strides = [1, 1]} : vector<24x128xf32> to vector<8x128xf32>
    %396 = arith.mulf %385, %395 : vector<8x128xf32>
    %397 = arith.addf %394, %396 : vector<8x128xf32>
    %398 = math.tanh %397 : vector<8x128xf32>
    %cst_104 = arith.constant 1.000000e+00 : f32
    %399 = vector.broadcast %cst_104 : f32 to vector<8x128xf32>
    %400 = arith.subf %399, %393 : vector<8x128xf32>
    %401 = arith.mulf %400, %398 : vector<8x128xf32>
    %402 = arith.mulf %393, %336 : vector<8x128xf32>
    %403 = arith.addf %401, %402 : vector<8x128xf32>
    %c0_105 = arith.constant 0 : index
    %404 = arith.index_cast %c5_i32 : i32 to index
    %c0_106 = arith.constant 0 : index
    %c0_107 = arith.constant 0 : index
    %405 = vector.load %arg5[%c0_105, %404, %c0_106, %c0_107] : memref<1x8x8x128xf32, #tpu.memory_space<vmem>>, vector<1x1x8x128xf32>
    %406 = vector.shape_cast %405 : vector<1x1x8x128xf32> to vector<8x128xf32>
    %407 = vector.shape_cast %403 : vector<8x128xf32> to vector<1x1x8x128xf32>
    tpu.vector_store %arg5[%c0_105, %404, %c0_106, %c0_107], %407 {strides = array<i32>} : memref<1x8x8x128xf32, #tpu.memory_space<vmem>>, vector<1x1x8x128xf32>,
    %c6_i32 = arith.constant 6 : i32
    %c0_108 = arith.constant 0 : index
    %408 = arith.index_cast %c6_i32 : i32 to index
    %c0_109 = arith.constant 0 : index
    %c0_110 = arith.constant 0 : index
    %409 = vector.load %arg2[%c0_108, %408, %c0_109, %c0_110] : memref<1x8x24x128xf32, #tpu.memory_space<vmem>>, vector<1x1x24x128xf32>
    %410 = vector.shape_cast %409 : vector<1x1x24x128xf32> to vector<24x128xf32>
    %c9_i32_111 = arith.constant 9 : i32
    %411 = tpu.dynamic_rotate %403 by %c9_i32_111 dim 1 : vector<8x128xf32>, i32 -> vector<8x128xf32>
    %412 = vector.extract_strided_slice %4 {offsets = [0, 0, 0], sizes = [1, 8, 128], strides = [1, 1, 1]} : vector<9x8x128xf32> to vector<1x8x128xf32>
    %413 = vector.shape_cast %412 : vector<1x8x128xf32> to vector<8x128xf32>
    %414 = arith.mulf %411, %413 : vector<8x128xf32>
    %c8_i32_112 = arith.constant 8 : i32
    %415 = tpu.dynamic_rotate %403 by %c8_i32_112 dim 1 : vector<8x128xf32>, i32 -> vector<8x128xf32>
    %416 = vector.extract_strided_slice %4 {offsets = [1, 0, 0], sizes = [1, 8, 128], strides = [1, 1, 1]} : vector<9x8x128xf32> to vector<1x8x128xf32>
    %417 = vector.shape_cast %416 : vector<1x8x128xf32> to vector<8x128xf32>
    %418 = arith.mulf %415, %417 : vector<8x128xf32>
    %c7_i32_113 = arith.constant 7 : i32
    %419 = tpu.dynamic_rotate %403 by %c7_i32_113 dim 1 : vector<8x128xf32>, i32 -> vector<8x128xf32>
    %420 = vector.extract_strided_slice %4 {offsets = [2, 0, 0], sizes = [1, 8, 128], strides = [1, 1, 1]} : vector<9x8x128xf32> to vector<1x8x128xf32>
    %421 = vector.shape_cast %420 : vector<1x8x128xf32> to vector<8x128xf32>
    %422 = arith.mulf %419, %421 : vector<8x128xf32>
    %c1_i32_114 = arith.constant 1 : i32
    %423 = tpu.dynamic_rotate %403 by %c1_i32_114 dim 1 : vector<8x128xf32>, i32 -> vector<8x128xf32>
    %424 = vector.extract_strided_slice %4 {offsets = [3, 0, 0], sizes = [1, 8, 128], strides = [1, 1, 1]} : vector<9x8x128xf32> to vector<1x8x128xf32>
    %425 = vector.shape_cast %424 : vector<1x8x128xf32> to vector<8x128xf32>
    %426 = arith.mulf %423, %425 : vector<8x128xf32>
    %c127_i32_115 = arith.constant 127 : i32
    %427 = tpu.dynamic_rotate %403 by %c127_i32_115 dim 1 : vector<8x128xf32>, i32 -> vector<8x128xf32>
    %428 = vector.extract_strided_slice %4 {offsets = [5, 0, 0], sizes = [1, 8, 128], strides = [1, 1, 1]} : vector<9x8x128xf32> to vector<1x8x128xf32>
    %429 = vector.shape_cast %428 : vector<1x8x128xf32> to vector<8x128xf32>
    %430 = arith.mulf %427, %429 : vector<8x128xf32>
    %c121_i32_116 = arith.constant 121 : i32
    %431 = tpu.dynamic_rotate %403 by %c121_i32_116 dim 1 : vector<8x128xf32>, i32 -> vector<8x128xf32>
    %432 = vector.extract_strided_slice %4 {offsets = [6, 0, 0], sizes = [1, 8, 128], strides = [1, 1, 1]} : vector<9x8x128xf32> to vector<1x8x128xf32>
    %433 = vector.shape_cast %432 : vector<1x8x128xf32> to vector<8x128xf32>
    %434 = arith.mulf %431, %433 : vector<8x128xf32>
    %c120_i32_117 = arith.constant 120 : i32
    %435 = tpu.dynamic_rotate %403 by %c120_i32_117 dim 1 : vector<8x128xf32>, i32 -> vector<8x128xf32>
    %436 = vector.extract_strided_slice %4 {offsets = [7, 0, 0], sizes = [1, 8, 128], strides = [1, 1, 1]} : vector<9x8x128xf32> to vector<1x8x128xf32>
    %437 = vector.shape_cast %436 : vector<1x8x128xf32> to vector<8x128xf32>
    %438 = arith.mulf %435, %437 : vector<8x128xf32>
    %c119_i32_118 = arith.constant 119 : i32
    %439 = tpu.dynamic_rotate %403 by %c119_i32_118 dim 1 : vector<8x128xf32>, i32 -> vector<8x128xf32>
    %440 = vector.extract_strided_slice %4 {offsets = [8, 0, 0], sizes = [1, 8, 128], strides = [1, 1, 1]} : vector<9x8x128xf32> to vector<1x8x128xf32>
    %441 = vector.shape_cast %440 : vector<1x8x128xf32> to vector<8x128xf32>
    %442 = arith.mulf %439, %441 : vector<8x128xf32>
    %443 = tpu.concatenate %414, %418, %422, %426, %403, %430, %434, %438, %442 in 0 : vector<8x128xf32>, vector<8x128xf32>, vector<8x128xf32>, vector<8x128xf32>, vector<8x128xf32>, vector<8x128xf32>, vector<8x128xf32>, vector<8x128xf32>, vector<8x128xf32> -> vector<72x128xf32>
    %cst_119 = arith.constant dense<0.000000e+00> : vector<24x128xf32>
    %444 = tpu.matmul %3, %443, %cst_119 {dimension_numbers = #tpu.dot_dimension_numbers<[1], [0], [0], [1], [0, 0, 1, 1], [], []>} : vector<24x72xf32>, vector<72x128xf32>, vector<24x128xf32> -> vector<24x128xf32>
    %445 = vector.extract_strided_slice %410 {offsets = [0, 0], sizes = [8, 128], strides = [1, 1]} : vector<24x128xf32> to vector<8x128xf32>
    %446 = vector.extract_strided_slice %444 {offsets = [0, 0], sizes = [8, 128], strides = [1, 1]} : vector<24x128xf32> to vector<8x128xf32>
    %447 = arith.addf %445, %446 : vector<8x128xf32>
    %448 = arith.negf %447 : vector<8x128xf32>
    %449 = math.exp %448 : vector<8x128xf32>
    %cst_120 = arith.constant 1.000000e+00 : f32
    %450 = vector.broadcast %cst_120 : f32 to vector<8x128xf32>
    %451 = arith.addf %450, %449 : vector<8x128xf32>
    %452 = arith.divf %450, %451 : vector<8x128xf32>
    %453 = vector.extract_strided_slice %410 {offsets = [8, 0], sizes = [8, 128], strides = [1, 1]} : vector<24x128xf32> to vector<8x128xf32>
    %454 = vector.extract_strided_slice %444 {offsets = [8, 0], sizes = [8, 128], strides = [1, 1]} : vector<24x128xf32> to vector<8x128xf32>
    %455 = arith.addf %453, %454 : vector<8x128xf32>
    %456 = arith.negf %455 : vector<8x128xf32>
    %457 = math.exp %456 : vector<8x128xf32>
    %cst_121 = arith.constant 1.000000e+00 : f32
    %458 = vector.broadcast %cst_121 : f32 to vector<8x128xf32>
    %459 = arith.addf %458, %457 : vector<8x128xf32>
    %460 = arith.divf %458, %459 : vector<8x128xf32>
    %461 = vector.extract_strided_slice %410 {offsets = [16, 0], sizes = [8, 128], strides = [1, 1]} : vector<24x128xf32> to vector<8x128xf32>
    %462 = vector.extract_strided_slice %444 {offsets = [16, 0], sizes = [8, 128], strides = [1, 1]} : vector<24x128xf32> to vector<8x128xf32>
    %463 = arith.mulf %452, %462 : vector<8x128xf32>
    %464 = arith.addf %461, %463 : vector<8x128xf32>
    %465 = math.tanh %464 : vector<8x128xf32>
    %cst_122 = arith.constant 1.000000e+00 : f32
    %466 = vector.broadcast %cst_122 : f32 to vector<8x128xf32>
    %467 = arith.subf %466, %460 : vector<8x128xf32>
    %468 = arith.mulf %467, %465 : vector<8x128xf32>
    %469 = arith.mulf %460, %403 : vector<8x128xf32>
    %470 = arith.addf %468, %469 : vector<8x128xf32>
    %c0_123 = arith.constant 0 : index
    %471 = arith.index_cast %c6_i32 : i32 to index
    %c0_124 = arith.constant 0 : index
    %c0_125 = arith.constant 0 : index
    %472 = vector.load %arg5[%c0_123, %471, %c0_124, %c0_125] : memref<1x8x8x128xf32, #tpu.memory_space<vmem>>, vector<1x1x8x128xf32>
    %473 = vector.shape_cast %472 : vector<1x1x8x128xf32> to vector<8x128xf32>
    %474 = vector.shape_cast %470 : vector<8x128xf32> to vector<1x1x8x128xf32>
    tpu.vector_store %arg5[%c0_123, %471, %c0_124, %c0_125], %474 {strides = array<i32>} : memref<1x8x8x128xf32, #tpu.memory_space<vmem>>, vector<1x1x8x128xf32>,
    %c7_i32_126 = arith.constant 7 : i32
    %c0_127 = arith.constant 0 : index
    %475 = arith.index_cast %c7_i32_126 : i32 to index
    %c0_128 = arith.constant 0 : index
    %c0_129 = arith.constant 0 : index
    %476 = vector.load %arg2[%c0_127, %475, %c0_128, %c0_129] : memref<1x8x24x128xf32, #tpu.memory_space<vmem>>, vector<1x1x24x128xf32>
    %477 = vector.shape_cast %476 : vector<1x1x24x128xf32> to vector<24x128xf32>
    %c9_i32_130 = arith.constant 9 : i32
    %478 = tpu.dynamic_rotate %470 by %c9_i32_130 dim 1 : vector<8x128xf32>, i32 -> vector<8x128xf32>
    %479 = vector.extract_strided_slice %4 {offsets = [0, 0, 0], sizes = [1, 8, 128], strides = [1, 1, 1]} : vector<9x8x128xf32> to vector<1x8x128xf32>
    %480 = vector.shape_cast %479 : vector<1x8x128xf32> to vector<8x128xf32>
    %481 = arith.mulf %478, %480 : vector<8x128xf32>
    %c8_i32_131 = arith.constant 8 : i32
    %482 = tpu.dynamic_rotate %470 by %c8_i32_131 dim 1 : vector<8x128xf32>, i32 -> vector<8x128xf32>
    %483 = vector.extract_strided_slice %4 {offsets = [1, 0, 0], sizes = [1, 8, 128], strides = [1, 1, 1]} : vector<9x8x128xf32> to vector<1x8x128xf32>
    %484 = vector.shape_cast %483 : vector<1x8x128xf32> to vector<8x128xf32>
    %485 = arith.mulf %482, %484 : vector<8x128xf32>
    %c7_i32_132 = arith.constant 7 : i32
    %486 = tpu.dynamic_rotate %470 by %c7_i32_132 dim 1 : vector<8x128xf32>, i32 -> vector<8x128xf32>
    %487 = vector.extract_strided_slice %4 {offsets = [2, 0, 0], sizes = [1, 8, 128], strides = [1, 1, 1]} : vector<9x8x128xf32> to vector<1x8x128xf32>
    %488 = vector.shape_cast %487 : vector<1x8x128xf32> to vector<8x128xf32>
    %489 = arith.mulf %486, %488 : vector<8x128xf32>
    %c1_i32_133 = arith.constant 1 : i32
    %490 = tpu.dynamic_rotate %470 by %c1_i32_133 dim 1 : vector<8x128xf32>, i32 -> vector<8x128xf32>
    %491 = vector.extract_strided_slice %4 {offsets = [3, 0, 0], sizes = [1, 8, 128], strides = [1, 1, 1]} : vector<9x8x128xf32> to vector<1x8x128xf32>
    %492 = vector.shape_cast %491 : vector<1x8x128xf32> to vector<8x128xf32>
    %493 = arith.mulf %490, %492 : vector<8x128xf32>
    %c127_i32_134 = arith.constant 127 : i32
    %494 = tpu.dynamic_rotate %470 by %c127_i32_134 dim 1 : vector<8x128xf32>, i32 -> vector<8x128xf32>
    %495 = vector.extract_strided_slice %4 {offsets = [5, 0, 0], sizes = [1, 8, 128], strides = [1, 1, 1]} : vector<9x8x128xf32> to vector<1x8x128xf32>
    %496 = vector.shape_cast %495 : vector<1x8x128xf32> to vector<8x128xf32>
    %497 = arith.mulf %494, %496 : vector<8x128xf32>
    %c121_i32_135 = arith.constant 121 : i32
    %498 = tpu.dynamic_rotate %470 by %c121_i32_135 dim 1 : vector<8x128xf32>, i32 -> vector<8x128xf32>
    %499 = vector.extract_strided_slice %4 {offsets = [6, 0, 0], sizes = [1, 8, 128], strides = [1, 1, 1]} : vector<9x8x128xf32> to vector<1x8x128xf32>
    %500 = vector.shape_cast %499 : vector<1x8x128xf32> to vector<8x128xf32>
    %501 = arith.mulf %498, %500 : vector<8x128xf32>
    %c120_i32_136 = arith.constant 120 : i32
    %502 = tpu.dynamic_rotate %470 by %c120_i32_136 dim 1 : vector<8x128xf32>, i32 -> vector<8x128xf32>
    %503 = vector.extract_strided_slice %4 {offsets = [7, 0, 0], sizes = [1, 8, 128], strides = [1, 1, 1]} : vector<9x8x128xf32> to vector<1x8x128xf32>
    %504 = vector.shape_cast %503 : vector<1x8x128xf32> to vector<8x128xf32>
    %505 = arith.mulf %502, %504 : vector<8x128xf32>
    %c119_i32_137 = arith.constant 119 : i32
    %506 = tpu.dynamic_rotate %470 by %c119_i32_137 dim 1 : vector<8x128xf32>, i32 -> vector<8x128xf32>
    %507 = vector.extract_strided_slice %4 {offsets = [8, 0, 0], sizes = [1, 8, 128], strides = [1, 1, 1]} : vector<9x8x128xf32> to vector<1x8x128xf32>
    %508 = vector.shape_cast %507 : vector<1x8x128xf32> to vector<8x128xf32>
    %509 = arith.mulf %506, %508 : vector<8x128xf32>
    %510 = tpu.concatenate %481, %485, %489, %493, %470, %497, %501, %505, %509 in 0 : vector<8x128xf32>, vector<8x128xf32>, vector<8x128xf32>, vector<8x128xf32>, vector<8x128xf32>, vector<8x128xf32>, vector<8x128xf32>, vector<8x128xf32>, vector<8x128xf32> -> vector<72x128xf32>
    %cst_138 = arith.constant dense<0.000000e+00> : vector<24x128xf32>
    %511 = tpu.matmul %3, %510, %cst_138 {dimension_numbers = #tpu.dot_dimension_numbers<[1], [0], [0], [1], [0, 0, 1, 1], [], []>} : vector<24x72xf32>, vector<72x128xf32>, vector<24x128xf32> -> vector<24x128xf32>
    %512 = vector.extract_strided_slice %477 {offsets = [0, 0], sizes = [8, 128], strides = [1, 1]} : vector<24x128xf32> to vector<8x128xf32>
    %513 = vector.extract_strided_slice %511 {offsets = [0, 0], sizes = [8, 128], strides = [1, 1]} : vector<24x128xf32> to vector<8x128xf32>
    %514 = arith.addf %512, %513 : vector<8x128xf32>
    %515 = arith.negf %514 : vector<8x128xf32>
    %516 = math.exp %515 : vector<8x128xf32>
    %cst_139 = arith.constant 1.000000e+00 : f32
    %517 = vector.broadcast %cst_139 : f32 to vector<8x128xf32>
    %518 = arith.addf %517, %516 : vector<8x128xf32>
    %519 = arith.divf %517, %518 : vector<8x128xf32>
    %520 = vector.extract_strided_slice %477 {offsets = [8, 0], sizes = [8, 128], strides = [1, 1]} : vector<24x128xf32> to vector<8x128xf32>
    %521 = vector.extract_strided_slice %511 {offsets = [8, 0], sizes = [8, 128], strides = [1, 1]} : vector<24x128xf32> to vector<8x128xf32>
    %522 = arith.addf %520, %521 : vector<8x128xf32>
    %523 = arith.negf %522 : vector<8x128xf32>
    %524 = math.exp %523 : vector<8x128xf32>
    %cst_140 = arith.constant 1.000000e+00 : f32
    %525 = vector.broadcast %cst_140 : f32 to vector<8x128xf32>
    %526 = arith.addf %525, %524 : vector<8x128xf32>
    %527 = arith.divf %525, %526 : vector<8x128xf32>
    %528 = vector.extract_strided_slice %477 {offsets = [16, 0], sizes = [8, 128], strides = [1, 1]} : vector<24x128xf32> to vector<8x128xf32>
    %529 = vector.extract_strided_slice %511 {offsets = [16, 0], sizes = [8, 128], strides = [1, 1]} : vector<24x128xf32> to vector<8x128xf32>
    %530 = arith.mulf %519, %529 : vector<8x128xf32>
    %531 = arith.addf %528, %530 : vector<8x128xf32>
    %532 = math.tanh %531 : vector<8x128xf32>
    %cst_141 = arith.constant 1.000000e+00 : f32
    %533 = vector.broadcast %cst_141 : f32 to vector<8x128xf32>
    %534 = arith.subf %533, %527 : vector<8x128xf32>
    %535 = arith.mulf %534, %532 : vector<8x128xf32>
    %536 = arith.mulf %527, %470 : vector<8x128xf32>
    %537 = arith.addf %535, %536 : vector<8x128xf32>
    %c0_142 = arith.constant 0 : index
    %538 = arith.index_cast %c7_i32_126 : i32 to index
    %c0_143 = arith.constant 0 : index
    %c0_144 = arith.constant 0 : index
    %539 = vector.load %arg5[%c0_142, %538, %c0_143, %c0_144] : memref<1x8x8x128xf32, #tpu.memory_space<vmem>>, vector<1x1x8x128xf32>
    %540 = vector.shape_cast %539 : vector<1x1x8x128xf32> to vector<8x128xf32>
    %541 = vector.shape_cast %537 : vector<8x128xf32> to vector<1x1x8x128xf32>
    tpu.vector_store %arg5[%c0_142, %538, %c0_143, %c0_144], %541 {strides = array<i32>} : memref<1x8x8x128xf32, #tpu.memory_space<vmem>>, vector<1x1x8x128xf32>,
    %c8_i32_145 = arith.constant 8 : i32
    %c0_146 = arith.constant 0 : index
    %c0_147 = arith.constant 0 : index
    %542 = vector.load %arg6[%c0_146, %c0_147] : memref<8x128xf32, #tpu.memory_space<vmem>>, vector<8x128xf32>
    tpu.vector_store %arg6[%c0_146, %c0_147], %537 {strides = array<i32>} : memref<8x128xf32, #tpu.memory_space<vmem>>, vector<8x128xf32>,
    return
  }
  func.func @transform_0(%arg0: i32, %arg1: i32) -> (i32, i32, i32, i32) {
    %c0_i32 = arith.constant 0 : i32
    %c0_i32_0 = arith.constant 0 : i32
    %c0_i32_1 = arith.constant 0 : i32
    return %arg0, %arg1, %c0_i32, %c0_i32_0 : i32, i32, i32, i32
  }
  func.func @transform_1(%arg0: i32, %arg1: i32) -> (i32, i32) {
    %c0_i32 = arith.constant 0 : i32
    %c0_i32_0 = arith.constant 0 : i32
    %c0_i32_1 = arith.constant 0 : i32
    return %c0_i32, %c0_i32_0 : i32, i32
  }
  func.func @transform_2(%arg0: i32, %arg1: i32) -> (i32, i32, i32) {
    %c0_i32 = arith.constant 0 : i32
    %c0_i32_0 = arith.constant 0 : i32
    %c0_i32_1 = arith.constant 0 : i32
    %c0_i32_2 = arith.constant 0 : i32
    return %c0_i32, %c0_i32_0, %c0_i32_1 : i32, i32, i32
  }
  func.func @transform_3(%arg0: i32, %arg1: i32) -> (i32, i32, i32, i32) {
    %c0_i32 = arith.constant 0 : i32
    %c0_i32_0 = arith.constant 0 : i32
    %c0_i32_1 = arith.constant 0 : i32
    return %arg0, %arg1, %c0_i32, %c0_i32_0 : i32, i32, i32, i32
  }
}

</mosaic_0001>

<llo_original>
// kernel: tile.11
$region0: #{tile.11}
  %s0 = inlined_call_operand.vmem [shape: f32[9,2,64], index: 0, kind: input, shape index: {}]
  %s1 = inlined_call_operand.vmem [shape: f32[9,128], index: 1, kind: output, shape index: {}]
  $region1: #{tile.11} parent=0
    #allocation0 [shape = 'u8[36864]{0}', space=vmem, size = 0x9000, scoped, tag = 'scoped mem for input reshape']
    %s3 = sshll.u32 1, 2
    %s4 = ssub.s32 %s3, 1
    %s5 = smul.addr 2, 8
    %s6 = scalar_lea.vmem %s0, %s5
    %v7 = vld [vmem:[%s6] sm:%s4]
    %s8 = scalar_lea.vmem [#allocation0], 64
    %9 = vst [vmem:[%s8] sm:%s4] %v7
    %s10 = smul.addr 2, 7
    %s11 = scalar_lea.vmem %s0, %s10
    %v12 = vld [vmem:[%s11] sm:%s4]
    %s13 = scalar_lea.vmem [#allocation0], 56
    %14 = vst [vmem:[%s13] sm:%s4] %v12
    %s15 = smul.addr 2, 6
    %s16 = scalar_lea.vmem %s0, %s15
    %v17 = vld [vmem:[%s16] sm:%s4]
    %s18 = scalar_lea.vmem [#allocation0], 48
    %19 = vst [vmem:[%s18] sm:%s4] %v17
    %s20 = smul.addr 2, 5
    %s21 = scalar_lea.vmem %s0, %s20
    %v22 = vld [vmem:[%s21] sm:%s4]
    %s23 = scalar_lea.vmem [#allocation0], 40
    %24 = vst [vmem:[%s23] sm:%s4] %v22
    %s25 = smul.addr 2, 4
    %s26 = scalar_lea.vmem %s0, %s25
    %v27 = vld [vmem:[%s26] sm:%s4]
    %s28 = scalar_lea.vmem [#allocation0], 32
    %29 = vst [vmem:[%s28] sm:%s4] %v27
    %s30 = smul.addr 2, 3
    %s31 = scalar_lea.vmem %s0, %s30
    %v32 = vld [vmem:[%s31] sm:%s4]
    %s33 = scalar_lea.vmem [#allocation0], 24
    %34 = vst [vmem:[%s33] sm:%s4] %v32
    %s35 = smul.addr 2, 2
    %s36 = scalar_lea.vmem %s0, %s35
    %v37 = vld [vmem:[%s36] sm:%s4]
    %s38 = scalar_lea.vmem [#allocation0], 16
    %39 = vst [vmem:[%s38] sm:%s4] %v37
    %s40 = scalar_lea.vmem %s0, 2
    %v41 = vld [vmem:[%s40] sm:%s4]
    %s42 = scalar_lea.vmem [#allocation0], 8
    %43 = vst [vmem:[%s42] sm:%s4] %v41
    %v44 = vld [vmem:[%s0] sm:%s4]
    %45 = vst [vmem:[#allocation0] sm:%s4] %v44
    %v46 = vld [vmem:[#allocation0] ss:$8 sm:$0xf]
    %v47 = vld [vmem:[#allocation0] ss:$8 sm:$0xf0]
    %vm48 = vcmask 1047556
    %v49 = vsel %vm48, %v47, %v46
    %vm50 = vcmask 523264
    %51 = vst.msk [vmem:[%s1] sm:$0xff] %vm50, %v49
    %s52 = scalar_lea.vmem [#allocation0], 64
    %v53 = vld [vmem:[%s52] sm:$0x1]
    %vm54 = vcmask 523264
    %s55 = scalar_lea.vmem %s1, 8
    %56 = vst.msk [vmem:[%s55] sm:$0x1] %vm54, %v53
    %s57 = scalar_lea.vmem [#allocation0], 1
    %v58 = vld [vmem:[%s57] ss:$8 sm:$0xf]
    %s59 = scalar_lea.vmem [#allocation0], 1
    %v60 = vld [vmem:[%s59] ss:$8 sm:$0xf0]
    %vm61 = vcmask 1047556
    %v62 = vsel %vm61, %v60, %v58
    %63 = vrot.lane.b32.xlu0 %v62, 64
    %v64 = vpop.permute.xlu0 %63
    %vm65 = vcmask 1048064
    %66 = vst.msk [vmem:[%s1] sm:$0xff] %vm65, %v64
    %s67 = scalar_lea.vmem [#allocation0], 65
    %v68 = vld [vmem:[%s67] sm:$0x1]
    %69 = vrot.lane.b32.xlu0 %v68, 64
    %v70 = vpop.permute.xlu0 %69
    %vm71 = vcmask 1048064
    %s72 = scalar_lea.vmem %s1, 8
    %73 = vst.msk [vmem:[%s72] sm:$0x1] %vm71, %v70

// kernel: rgru_forward.2
$region0: #{rgru_forward.2}
  #allocation0 [shape = 'u32[]', space=smem, size = 0x4, offset = 0x4, fixed_abs, tag = 'smem constant byte address 0x4 - core index']
  #allocation1 [shape = 'u32[144,128]{1,0:T(1,128)}', space=vmem, size = 0x12000, scoped, tag = 'internal scratch']
  #allocation2 [shape = 'f32[8,128]{1,0:T(8,128)}', space=vmem, size = 0x1000, scoped, tag = 'scratch operand']
  %s0 = inlined_call_operand.vmem [shape: f32[1,8,24,128], index: 0, kind: input, shape index: {}]
  %s1 = inlined_call_operand.vmem [shape: f32[24,72], index: 1, kind: input, shape index: {}]
  %s2 = inlined_call_operand.vmem [shape: f32[9,8,128], index: 2, kind: input, shape index: {}]
  %s3 = inlined_call_operand.vmem [shape: f32[1,8,8,128], index: 3, kind: output, shape index: {}]
  %s4 = sld [smem:[#allocation0]]
  $region26: #{rgru_forward.2} parent=0
    _
  %s6 = ssub.s32 1, %s4
  %s7 = scalar_select 0, %s6, %s4
  // Predicated region
  $region2: #{rgru_forward.2} parent=0 // pred_check
    _
  $region3: #{rgru_forward.2} parent=0 // pred_check_branch
    %9 = sbr.rel (0) target = $region5
  $region4: #{rgru_forward.2} parent=0 // pred_region
    _
  $region5: #{rgru_forward.2} parent=0 // pred_fallthru
    _
  // Predicated region
  $region6: #{rgru_forward.2} parent=0 // pred_check
    _
  $region7: #{rgru_forward.2} parent=0 // pred_check_branch
    %11 = sbr.rel (0) target = $region9
  $region8: #{rgru_forward.2} parent=0 // pred_region
    _
  $region9: #{rgru_forward.2} parent=0 // pred_fallthru
    _
  // Predicated region
  $region10: #{rgru_forward.2} parent=0 // pred_check
    _
  $region11: #{rgru_forward.2} parent=0 // pred_check_branch
    %13 = sbr.rel (0) target = $region13
  $region12: #{rgru_forward.2} parent=0 // pred_region
    _
  $region13: #{rgru_forward.2} parent=0 // pred_fallthru
    _
  %p14 = scmp.eq.s32.totalorder 0, 0
  // Predicated region
  $region14: #{rgru_forward.2} parent=0 // pred_check
    %p15 = pneg %p14
  $region15: #{rgru_forward.2} parent=0 // pred_check_branch
    %17 = sbr.rel (%p15) target = $region17
  $region16: #{rgru_forward.2} parent=0 // pred_region
    %18 = vst [vmem:[#allocation2] sm:$0xff] 0.0
  $region17: #{rgru_forward.2} parent=0 // pred_fallthru
    _
  %v19 = vld [vmem:[%s1] sm:$0xff]
  %v20 = vld [vmem:[%s1 + $0x8] sm:$0xff]
  %v21 = vld [vmem:[%s1 + $0x10] sm:$0xff]
  %v22 = vld [vmem:[%s2] sm:$0xff]
  %v23 = vld [vmem:[%s2 + $0x8] sm:$0xff]
  %v24 = vld [vmem:[%s2 + $0x10] sm:$0xff]
  %v25 = vld [vmem:[%s2 + $0x18] sm:$0xff]
  %v26 = vld [vmem:[%s2 + $0x28] sm:$0xff]
  %v27 = vld [vmem:[%s2 + $0x30] sm:$0xff]
  %v28 = vld [vmem:[%s2 + $0x38] sm:$0xff]
  %v29 = vld [vmem:[%s2 + $0x40] sm:$0xff]
  %v30 = vld [vmem:[#allocation2] sm:$0xff]
  %v31 = vld [vmem:[%s0] sm:$0xff]
  %v32 = vld [vmem:[%s0 + $0x8] sm:$0xff]
  %v33 = vld [vmem:[%s0 + $0x10] sm:$0xff]
  %34 = vrot.lane.b32.xlu0 %v30, 9
  %v35 = vpop.permute.xlu0 %34
  %v36 = vmul.f32 %v35, %v22
  %37 = vrot.lane.b32.xlu0 %v30, 8
  %v38 = vpop.permute.xlu0 %37
  %v39 = vmul.f32 %v38, %v23
  %40 = vrot.lane.b32.xlu0 %v30, 7
  %v41 = vpop.permute.xlu0 %40
  %v42 = vmul.f32 %v41, %v24
  %43 = vrot.lane.b32.xlu0 %v30, 1
  %v44 = vpop.permute.xlu0 %43
  %v45 = vmul.f32 %v44, %v25
  %46 = vrot.lane.b32.xlu0 %v30, 127
  %v47 = vpop.permute.xlu0 %46
  %v48 = vmul.f32 %v47, %v26
  %49 = vrot.lane.b32.xlu0 %v30, 121
  %v50 = vpop.permute.xlu0 %49
  %v51 = vmul.f32 %v50, %v27
  %52 = vrot.lane.b32.xlu0 %v30, 120
  %v53 = vpop.permute.xlu0 %52
  %v54 = vmul.f32 %v53, %v28
  %55 = vrot.lane.b32.xlu0 %v30, 119
  %v56 = vpop.permute.xlu0 %55
  %v57 = vmul.f32 %v56, %v29
  %vm58 = vcmask 588800
  %v60 = vsel %vm58, %v19, 0
  %v63 = vsel %vm58, %v20, 0
  %v66 = vsel %vm58, %v21, 0
  %68 = vmatprep.subr.mxu0 0.0
  %69 = vmatpush1.msra.mxu0 0.0
  %70 = vmatprep.subr.mxu0 0.0
  %71 = vmatpush1.msra.mxu0 0.0
  %72 = vmatprep.subr.mxu0 0.0
  %73 = vmatpush1.msra.mxu0 0.0
  %74 = vmatprep.subr.mxu0 0.0
  %75 = vmatpush1.msra.mxu0 0.0
  %76 = vmatprep.subr.mxu0 0.0
  %77 = vmatpush1.msra.mxu0 0.0
  %78 = vmatprep.subr.mxu0 0.0
  %79 = vmatpush1.msra.mxu0 0.0
  %80 = vmatprep.subr.mxu0 0.0
  %81 = vmatpush1.msra.mxu0 0.0
  %82 = vmatprep.subr.mxu0 0.0
  %83 = vmatpush1.msra.mxu0 %v57
  %84 = vmatprep.subr.mxu0 0.0
  %85 = vmatpush1.msra.mxu0 %v54
  %86 = vmatprep.subr.mxu0 0.0
  %87 = vmatpush1.msra.mxu0 %v51
  %88 = vmatprep.subr.mxu0 0.0
  %89 = vmatpush1.msra.mxu0 %v48
  %90 = vmatprep.subr.mxu0 0.0
  %91 = vmatpush1.msra.mxu0 %v30
  %92 = vmatprep.subr.mxu0 0.0
  %93 = vmatpush1.msra.mxu0 %v45
  %94 = vmatprep.subr.mxu0 0.0
  %95 = vmatpush1.msra.mxu0 %v42
  %96 = vmatprep.subr.mxu0 0.0
  %97 = vmatpush1.msra.mxu0 %v39
  %98 = vmatprep.subr.mxu0 0.0
  %99 = vmatpush1.msra.mxu0 %v36
  %100 = vmatprep.subr.mxu0 0.0
  %101 = vmatpush2.msra.mxu0 0.0
  %102 = vmatprep.subr.mxu0 0.0
  %103 = vmatpush2.msra.mxu0 0.0
  %104 = vmatprep.subr.mxu0 0.0
  %105 = vmatpush2.msra.mxu0 0.0
  %106 = vmatprep.subr.mxu0 0.0
  %107 = vmatpush2.msra.mxu0 0.0
  %108 = vmatprep.subr.mxu0 0.0
  %109 = vmatpush2.msra.mxu0 0.0
  %110 = vmatprep.subr.mxu0 0.0
  %111 = vmatpush2.msra.mxu0 0.0
  %112 = vmatprep.subr.mxu0 0.0
  %113 = vmatpush2.msra.mxu0 0.0
  %114 = vmatprep.subr.mxu0 0.0
  %115 = vmatpush2.msra.mxu0 0.0
  %116 = vmatprep.subr.mxu0 0.0
  %117 = vmatpush2.msra.mxu0 0.0
  %118 = vmatprep.subr.mxu0 0.0
  %119 = vmatpush2.msra.mxu0 0.0
  %120 = vmatprep.subr.mxu0 0.0
  %121 = vmatpush2.msra.mxu0 0.0
  %122 = vmatprep.subr.mxu0 0.0
  %123 = vmatpush2.msra.mxu0 0.0
  %124 = vmatprep.subr.mxu0 0.0
  %125 = vmatpush2.msra.mxu0 0.0
  %126 = vmatprep.subr.mxu0 0.0
  %127 = vmatpush2.msra.mxu0 0.0
  %128 = vmatprep.subr.mxu0 0.0
  %129 = vmatpush2.msra.mxu0 0.0
  %130 = vmatprep.subr.mxu0 0.0
  %131 = vmatpush2.msra.mxu0 0.0
  %132 = vmatprep.mubr.f32.mxu0 0.0
  %133 = vmatmul.mubr.f32.gmra.mxu0 %v60
  %v134 = vpop.f32.mrf.mxu0
  %v135 = vadd.f32 0.0, %v134
  %v136 = vpop.f32.mrf.mxu0
  %137 = vmatprep.mubr.f32.mxu0 0.0
  %138 = vmatmul.mubr.f32.gmra.mxu0 %v63
  %v139 = vpop.f32.mrf.mxu0
  %v140 = vadd.f32 0.0, %v139
  %v141 = vpop.f32.mrf.mxu0
  %142 = vmatprep.mubr.f32.mxu0 0.0
  %143 = vmatmul.mubr.f32.gmra.mxu0 %v66
  %v144 = vpop.f32.mrf.mxu0
  %v145 = vadd.f32 0.0, %v144
  %v146 = vpop.f32.mrf.mxu0
  %147 = vdwg.mxu0
  %v148 = vadd.f32 %v31, %v135
  %v149 = vxor.u32 %v148, 2147483648
  %v150 = vmul.f32 %v149, 1.442695
  %v151 = vpow.pop %v150
  %v152 = vadd.f32 %v151, 1.0
  %v153 = vrcp.pop %v152
  %v154 = vmul.f32 1.0, %v153
  %v155 = vadd.f32 %v32, %v140
  %v156 = vxor.u32 %v155, 2147483648
  %v157 = vmul.f32 %v156, 1.442695
  %v158 = vpow.pop %v157
  %v159 = vadd.f32 %v158, 1.0
  %v160 = vrcp.pop %v159
  %v161 = vmul.f32 1.0, %v160
  %v162 = vmul.f32 %v154, %v145
  %v163 = vadd.f32 %v33, %v162
  %v164 = vtanh.pop %v163
  %v165 = vsub.f32 1.0, %v161
  %v166 = vmul.f32 %v165, %v164
  %v167 = vmul.f32 %v161, %v30
  %v168 = vadd.f32 %v166, %v167
  %169 = vst [vmem:[%s3] sm:$0xff] %v168
  %s170 = scalar_lea.vmem %s0, 24
  %v171 = vld [vmem:[%s170] sm:$0xff]
  %v172 = vld [vmem:[%s170 + $0x8] sm:$0xff]
  %v173 = vld [vmem:[%s170 + $0x10] sm:$0xff]
  %174 = vrot.lane.b32.xlu0 %v168, 9
  %v175 = vpop.permute.xlu0 %174
  %v176 = vmul.f32 %v175, %v22
  %177 = vrot.lane.b32.xlu0 %v168, 8
  %v178 = vpop.permute.xlu0 %177
  %v179 = vmul.f32 %v178, %v23
  %180 = vrot.lane.b32.xlu0 %v168, 7
  %v181 = vpop.permute.xlu0 %180
  %v182 = vmul.f32 %v181, %v24
  %183 = vrot.lane.b32.xlu0 %v168, 1
  %v184 = vpop.permute.xlu0 %183
  %v185 = vmul.f32 %v184, %v25
  %186 = vrot.lane.b32.xlu0 %v168, 127
  %v187 = vpop.permute.xlu0 %186
  %v188 = vmul.f32 %v187, %v26
  %189 = vrot.lane.b32.xlu0 %v168, 121
  %v190 = vpop.permute.xlu0 %189
  %v191 = vmul.f32 %v190, %v27
  %192 = vrot.lane.b32.xlu0 %v168, 120
  %v193 = vpop.permute.xlu0 %192
  %v194 = vmul.f32 %v193, %v28
  %195 = vrot.lane.b32.xlu0 %v168, 119
  %v196 = vpop.permute.xlu0 %195
  %v197 = vmul.f32 %v196, %v29
  %198 = vmatprep.subr.mxu0 0.0
  %199 = vmatpush1.msra.mxu0 0.0
  %200 = vmatprep.subr.mxu0 0.0
  %201 = vmatpush1.msra.mxu0 0.0
  %202 = vmatprep.subr.mxu0 0.0
  %203 = vmatpush1.msra.mxu0 0.0
  %204 = vmatprep.subr.mxu0 0.0
  %205 = vmatpush1.msra.mxu0 0.0
  %206 = vmatprep.subr.mxu0 0.0
  %207 = vmatpush1.msra.mxu0 0.0
  %208 = vmatprep.subr.mxu0 0.0
  %209 = vmatpush1.msra.mxu0 0.0
  %210 = vmatprep.subr.mxu0 0.0
  %211 = vmatpush1.msra.mxu0 0.0
  %212 = vmatprep.subr.mxu0 0.0
  %213 = vmatpush1.msra.mxu0 %v197
  %214 = vmatprep.subr.mxu0 0.0
  %215 = vmatpush1.msra.mxu0 %v194
  %216 = vmatprep.subr.mxu0 0.0
  %217 = vmatpush1.msra.mxu0 %v191
  %218 = vmatprep.subr.mxu0 0.0
  %219 = vmatpush1.msra.mxu0 %v188
  %220 = vmatprep.subr.mxu0 0.0
  %221 = vmatpush1.msra.mxu0 %v168
  %222 = vmatprep.subr.mxu0 0.0
  %223 = vmatpush1.msra.mxu0 %v185
  %224 = vmatprep.subr.mxu0 0.0
  %225 = vmatpush1.msra.mxu0 %v182
  %226 = vmatprep.subr.mxu0 0.0
  %227 = vmatpush1.msra.mxu0 %v179
  %228 = vmatprep.subr.mxu0 0.0
  %229 = vmatpush1.msra.mxu0 %v176
  %230 = vmatprep.subr.mxu0 0.0
  %231 = vmatpush2.msra.mxu0 0.0
  %232 = vmatprep.subr.mxu0 0.0
  %233 = vmatpush2.msra.mxu0 0.0
  %234 = vmatprep.subr.mxu0 0.0
  %235 = vmatpush2.msra.mxu0 0.0
  %236 = vmatprep.subr.mxu0 0.0
  %237 = vmatpush2.msra.mxu0 0.0
  %238 = vmatprep.subr.mxu0 0.0
  %239 = vmatpush2.msra.mxu0 0.0
  %240 = vmatprep.subr.mxu0 0.0
  %241 = vmatpush2.msra.mxu0 0.0
  %242 = vmatprep.subr.mxu0 0.0
  %243 = vmatpush2.msra.mxu0 0.0
  %244 = vmatprep.subr.mxu0 0.0
  %245 = vmatpush2.msra.mxu0 0.0
  %246 = vmatprep.subr.mxu0 0.0
  %247 = vmatpush2.msra.mxu0 0.0
  %248 = vmatprep.subr.mxu0 0.0
  %249 = vmatpush2.msra.mxu0 0.0
  %250 = vmatprep.subr.mxu0 0.0
  %251 = vmatpush2.msra.mxu0 0.0
  %252 = vmatprep.subr.mxu0 0.0
  %253 = vmatpush2.msra.mxu0 0.0
  %254 = vmatprep.subr.mxu0 0.0
  %255 = vmatpush2.msra.mxu0 0.0
  %256 = vmatprep.subr.mxu0 0.0
  %257 = vmatpush2.msra.mxu0 0.0
  %258 = vmatprep.subr.mxu0 0.0
  %259 = vmatpush2.msra.mxu0 0.0
  %260 = vmatprep.subr.mxu0 0.0
  %261 = vmatpush2.msra.mxu0 0.0
  %262 = vmatprep.mubr.f32.mxu0 0.0
  %263 = vmatmul.mubr.f32.gmra.mxu0 %v60
  %v264 = vpop.f32.mrf.mxu0
  %v265 = vadd.f32 0.0, %v264
  %v266 = vpop.f32.mrf.mxu0
  %267 = vmatprep.mubr.f32.mxu0 0.0
  %268 = vmatmul.mubr.f32.gmra.mxu0 %v63
  %v269 = vpop.f32.mrf.mxu0
  %v270 = vadd.f32 0.0, %v269
  %v271 = vpop.f32.mrf.mxu0
  %272 = vmatprep.mubr.f32.mxu0 0.0
  %273 = vmatmul.mubr.f32.gmra.mxu0 %v66
  %v274 = vpop.f32.mrf.mxu0
  %v275 = vadd.f32 0.0, %v274
  %v276 = vpop.f32.mrf.mxu0
  %277 = vdwg.mxu0
  %v278 = vadd.f32 %v171, %v265
  %v279 = vxor.u32 %v278, 2147483648
  %v280 = vmul.f32 %v279, 1.442695
  %v281 = vpow.pop %v280
  %v282 = vadd.f32 %v281, 1.0
  %v283 = vrcp.pop %v282
  %v284 = vmul.f32 1.0, %v283
  %v285 = vadd.f32 %v172, %v270
  %v286 = vxor.u32 %v285, 2147483648
  %v287 = vmul.f32 %v286, 1.442695
  %v288 = vpow.pop %v287
  %v289 = vadd.f32 %v288, 1.0
  %v290 = vrcp.pop %v289
  %v291 = vmul.f32 1.0, %v290
  %v292 = vmul.f32 %v284, %v275
  %v293 = vadd.f32 %v173, %v292
  %v294 = vtanh.pop %v293
  %v295 = vsub.f32 1.0, %v291
  %v296 = vmul.f32 %v295, %v294
  %v297 = vmul.f32 %v291, %v168
  %v298 = vadd.f32 %v296, %v297
  %s299 = scalar_lea.vmem %s3, 8
  %300 = vst [vmem:[%s299] sm:$0xff] %v298
  %s301 = scalar_lea.vmem %s0, 48
  %v302 = vld [vmem:[%s301] sm:$0xff]
  %v303 = vld [vmem:[%s301 + $0x8] sm:$0xff]
  %v304 = vld [vmem:[%s301 + $0x10] sm:$0xff]
  %305 = vrot.lane.b32.xlu0 %v298, 9
  %v306 = vpop.permute.xlu0 %305
  %v307 = vmul.f32 %v306, %v22
  %308 = vrot.lane.b32.xlu0 %v298, 8
  %v309 = vpop.permute.xlu0 %308
  %v310 = vmul.f32 %v309, %v23
  %311 = vrot.lane.b32.xlu0 %v298, 7
  %v312 = vpop.permute.xlu0 %311
  %v313 = vmul.f32 %v312, %v24
  %314 = vrot.lane.b32.xlu0 %v298, 1
  %v315 = vpop.permute.xlu0 %314
  %v316 = vmul.f32 %v315, %v25
  %317 = vrot.lane.b32.xlu0 %v298, 127
  %v318 = vpop.permute.xlu0 %317
  %v319 = vmul.f32 %v318, %v26
  %320 = vrot.lane.b32.xlu0 %v298, 121
  %v321 = vpop.permute.xlu0 %320
  %v322 = vmul.f32 %v321, %v27
  %323 = vrot.lane.b32.xlu0 %v298, 120
  %v324 = vpop.permute.xlu0 %323
  %v325 = vmul.f32 %v324, %v28
  %326 = vrot.lane.b32.xlu0 %v298, 119
  %v327 = vpop.permute.xlu0 %326
  %v328 = vmul.f32 %v327, %v29
  %329 = vmatprep.subr.mxu0 0.0
  %330 = vmatpush1.msra.mxu0 0.0
  %331 = vmatprep.subr.mxu0 0.0
  %332 = vmatpush1.msra.mxu0 0.0
  %333 = vmatprep.subr.mxu0 0.0
  %334 = vmatpush1.msra.mxu0 0.0
  %335 = vmatprep.subr.mxu0 0.0
  %336 = vmatpush1.msra.mxu0 0.0
  %337 = vmatprep.subr.mxu0 0.0
  %338 = vmatpush1.msra.mxu0 0.0
  %339 = vmatprep.subr.mxu0 0.0
  %340 = vmatpush1.msra.mxu0 0.0
  %341 = vmatprep.subr.mxu0 0.0
  %342 = vmatpush1.msra.mxu0 0.0
  %343 = vmatprep.subr.mxu0 0.0
  %344 = vmatpush1.msra.mxu0 %v328
  %345 = vmatprep.subr.mxu0 0.0
  %346 = vmatpush1.msra.mxu0 %v325
  %347 = vmatprep.subr.mxu0 0.0
  %348 = vmatpush1.msra.mxu0 %v322
  %349 = vmatprep.subr.mxu0 0.0
  %350 = vmatpush1.msra.mxu0 %v319
  %351 = vmatprep.subr.mxu0 0.0
  %352 = vmatpush1.msra.mxu0 %v298
  %353 = vmatprep.subr.mxu0 0.0
  %354 = vmatpush1.msra.mxu0 %v316
  %355 = vmatprep.subr.mxu0 0.0
  %356 = vmatpush1.msra.mxu0 %v313
  %357 = vmatprep.subr.mxu0 0.0
  %358 = vmatpush1.msra.mxu0 %v310
  %359 = vmatprep.subr.mxu0 0.0
  %360 = vmatpush1.msra.mxu0 %v307
  %361 = vmatprep.subr.mxu0 0.0
  %362 = vmatpush2.msra.mxu0 0.0
  %363 = vmatprep.subr.mxu0 0.0
  %364 = vmatpush2.msra.mxu0 0.0
  %365 = vmatprep.subr.mxu0 0.0
  %366 = vmatpush2.msra.mxu0 0.0
  %367 = vmatprep.subr.mxu0 0.0
  %368 = vmatpush2.msra.mxu0 0.0
  %369 = vmatprep.subr.mxu0 0.0
  %370 = vmatpush2.msra.mxu0 0.0
  %371 = vmatprep.subr.mxu0 0.0
  %372 = vmatpush2.msra.mxu0 0.0
  %373 = vmatprep.subr.mxu0 0.0
  %374 = vmatpush2.msra.mxu0 0.0
  %375 = vmatprep.subr.mxu0 0.0
  %376 = vmatpush2.msra.mxu0 0.0
  %377 = vmatprep.subr.mxu0 0.0
  %378 = vmatpush2.msra.mxu0 0.0
  %379 = vmatprep.subr.mxu0 0.0
  %380 = vmatpush2.msra.mxu0 0.0
  %381 = vmatprep.subr.mxu0 0.0
  %382 = vmatpush2.msra.mxu0 0.0
  %383 = vmatprep.subr.mxu0 0.0
  %384 = vmatpush2.msra.mxu0 0.0
  %385 = vmatprep.subr.mxu0 0.0
  %386 = vmatpush2.msra.mxu0 0.0
  %387 = vmatprep.subr.mxu0 0.0
  %388 = vmatpush2.msra.mxu0 0.0
  %389 = vmatprep.subr.mxu0 0.0
  %390 = vmatpush2.msra.mxu0 0.0
  %391 = vmatprep.subr.mxu0 0.0
  %392 = vmatpush2.msra.mxu0 0.0
  %393 = vmatprep.mubr.f32.mxu0 0.0
  %394 = vmatmul.mubr.f32.gmra.mxu0 %v60
  %v395 = vpop.f32.mrf.mxu0
  %v396 = vadd.f32 0.0, %v395
  %v397 = vpop.f32.mrf.mxu0
  %398 = vmatprep.mubr.f32.mxu0 0.0
  %399 = vmatmul.mubr.f32.gmra.mxu0 %v63
  %v400 = vpop.f32.mrf.mxu0
  %v401 = vadd.f32 0.0, %v400
  %v402 = vpop.f32.mrf.mxu0
  %403 = vmatprep.mubr.f32.mxu0 0.0
  %404 = vmatmul.mubr.f32.gmra.mxu0 %v66
  %v405 = vpop.f32.mrf.mxu0
  %v406 = vadd.f32 0.0, %v405
  %v407 = vpop.f32.mrf.mxu0
  %408 = vdwg.mxu0
  %v409 = vadd.f32 %v302, %v396
  %v410 = vxor.u32 %v409, 2147483648
  %v411 = vmul.f32 %v410, 1.442695
  %v412 = vpow.pop %v411
  %v413 = vadd.f32 %v412, 1.0
  %v414 = vrcp.pop %v413
  %v415 = vmul.f32 1.0, %v414
  %v416 = vadd.f32 %v303, %v401
  %v417 = vxor.u32 %v416, 2147483648
  %v418 = vmul.f32 %v417, 1.442695
  %v419 = vpow.pop %v418
  %v420 = vadd.f32 %v419, 1.0
  %v421 = vrcp.pop %v420
  %v422 = vmul.f32 1.0, %v421
  %v423 = vmul.f32 %v415, %v406
  %v424 = vadd.f32 %v304, %v423
  %v425 = vtanh.pop %v424
  %v426 = vsub.f32 1.0, %v422
  %v427 = vmul.f32 %v426, %v425
  %v428 = vmul.f32 %v422, %v298
  %v429 = vadd.f32 %v427, %v428
  %s430 = scalar_lea.vmem %s3, 16
  %431 = vst [vmem:[%s430] sm:$0xff] %v429
  %s432 = scalar_lea.vmem %s0, 72
  %v433 = vld [vmem:[%s432] sm:$0xff]
  %v434 = vld [vmem:[%s432 + $0x8] sm:$0xff]
  %v435 = vld [vmem:[%s432 + $0x10] sm:$0xff]
  %436 = vrot.lane.b32.xlu0 %v429, 9
  %v437 = vpop.permute.xlu0 %436
  %v438 = vmul.f32 %v437, %v22
  %439 = vrot.lane.b32.xlu0 %v429, 8
  %v440 = vpop.permute.xlu0 %439
  %v441 = vmul.f32 %v440, %v23
  %442 = vrot.lane.b32.xlu0 %v429, 7
  %v443 = vpop.permute.xlu0 %442
  %v444 = vmul.f32 %v443, %v24
  %445 = vrot.lane.b32.xlu0 %v429, 1
  %v446 = vpop.permute.xlu0 %445
  %v447 = vmul.f32 %v446, %v25
  %448 = vrot.lane.b32.xlu0 %v429, 127
  %v449 = vpop.permute.xlu0 %448
  %v450 = vmul.f32 %v449, %v26
  %451 = vrot.lane.b32.xlu0 %v429, 121
  %v452 = vpop.permute.xlu0 %451
  %v453 = vmul.f32 %v452, %v27
  %454 = vrot.lane.b32.xlu0 %v429, 120
  %v455 = vpop.permute.xlu0 %454
  %v456 = vmul.f32 %v455, %v28
  %457 = vrot.lane.b32.xlu0 %v429, 119
  %v458 = vpop.permute.xlu0 %457
  %v459 = vmul.f32 %v458, %v29
  %460 = vmatprep.subr.mxu0 0.0
  %461 = vmatpush1.msra.mxu0 0.0
  %462 = vmatprep.subr.mxu0 0.0
  %463 = vmatpush1.msra.mxu0 0.0
  %464 = vmatprep.subr.mxu0 0.0
  %465 = vmatpush1.msra.mxu0 0.0
  %466 = vmatprep.subr.mxu0 0.0
  %467 = vmatpush1.msra.mxu0 0.0
  %468 = vmatprep.subr.mxu0 0.0
  %469 = vmatpush1.msra.mxu0 0.0
  %470 = vmatprep.subr.mxu0 0.0
  %471 = vmatpush1.msra.mxu0 0.0
  %472 = vmatprep.subr.mxu0 0.0
  %473 = vmatpush1.msra.mxu0 0.0
  %474 = vmatprep.subr.mxu0 0.0
  %475 = vmatpush1.msra.mxu0 %v459
  %476 = vmatprep.subr.mxu0 0.0
  %477 = vmatpush1.msra.mxu0 %v456
  %478 = vmatprep.subr.mxu0 0.0
  %479 = vmatpush1.msra.mxu0 %v453
  %480 = vmatprep.subr.mxu0 0.0
  %481 = vmatpush1.msra.mxu0 %v450
  %482 = vmatprep.subr.mxu0 0.0
  %483 = vmatpush1.msra.mxu0 %v429
  %484 = vmatprep.subr.mxu0 0.0
  %485 = vmatpush1.msra.mxu0 %v447
  %486 = vmatprep.subr.mxu0 0.0
  %487 = vmatpush1.msra.mxu0 %v444
  %488 = vmatprep.subr.mxu0 0.0
  %489 = vmatpush1.msra.mxu0 %v441
  %490 = vmatprep.subr.mxu0 0.0
  %491 = vmatpush1.msra.mxu0 %v438
  %492 = vmatprep.subr.mxu0 0.0
  %493 = vmatpush2.msra.mxu0 0.0
  %494 = vmatprep.subr.mxu0 0.0
  %495 = vmatpush2.msra.mxu0 0.0
  %496 = vmatprep.subr.mxu0 0.0
  %497 = vmatpush2.msra.mxu0 0.0
  %498 = vmatprep.subr.mxu0 0.0
  %499 = vmatpush2.msra.mxu0 0.0
  %500 = vmatprep.subr.mxu0 0.0
  %501 = vmatpush2.msra.mxu0 0.0
  %502 = vmatprep.subr.mxu0 0.0
  %503 = vmatpush2.msra.mxu0 0.0
  %504 = vmatprep.subr.mxu0 0.0
  %505 = vmatpush2.msra.mxu0 0.0
  %506 = vmatprep.subr.mxu0 0.0
  %507 = vmatpush2.msra.mxu0 0.0
  %508 = vmatprep.subr.mxu0 0.0
  %509 = vmatpush2.msra.mxu0 0.0
  %510 = vmatprep.subr.mxu0 0.0
  %511 = vmatpush2.msra.mxu0 0.0
  %512 = vmatprep.subr.mxu0 0.0
  %513 = vmatpush2.msra.mxu0 0.0
  %514 = vmatprep.subr.mxu0 0.0
  %515 = vmatpush2.msra.mxu0 0.0
  %516 = vmatprep.subr.mxu0 0.0
  %517 = vmatpush2.msra.mxu0 0.0
  %518 = vmatprep.subr.mxu0 0.0
  %519 = vmatpush2.msra.mxu0 0.0
  %520 = vmatprep.subr.mxu0 0.0
  %521 = vmatpush2.msra.mxu0 0.0
  %522 = vmatprep.subr.mxu0 0.0
  %523 = vmatpush2.msra.mxu0 0.0
  %524 = vmatprep.mubr.f32.mxu0 0.0
  %525 = vmatmul.mubr.f32.gmra.mxu0 %v60
  %v526 = vpop.f32.mrf.mxu0
  %v527 = vadd.f32 0.0, %v526
  %v528 = vpop.f32.mrf.mxu0
  %529 = vmatprep.mubr.f32.mxu0 0.0
  %530 = vmatmul.mubr.f32.gmra.mxu0 %v63
  %v531 = vpop.f32.mrf.mxu0
  %v532 = vadd.f32 0.0, %v531
  %v533 = vpop.f32.mrf.mxu0
  %534 = vmatprep.mubr.f32.mxu0 0.0
  %535 = vmatmul.mubr.f32.gmra.mxu0 %v66
  %v536 = vpop.f32.mrf.mxu0
  %v537 = vadd.f32 0.0, %v536
  %v538 = vpop.f32.mrf.mxu0
  %539 = vdwg.mxu0
  %v540 = vadd.f32 %v433, %v527
  %v541 = vxor.u32 %v540, 2147483648
  %v542 = vmul.f32 %v541, 1.442695
  %v543 = vpow.pop %v542
  %v544 = vadd.f32 %v543, 1.0
  %v545 = vrcp.pop %v544
  %v546 = vmul.f32 1.0, %v545
  %v547 = vadd.f32 %v434, %v532
  %v548 = vxor.u32 %v547, 2147483648
  %v549 = vmul.f32 %v548, 1.442695
  %v550 = vpow.pop %v549
  %v551 = vadd.f32 %v550, 1.0
  %v552 = vrcp.pop %v551
  %v553 = vmul.f32 1.0, %v552
  %v554 = vmul.f32 %v546, %v537
  %v555 = vadd.f32 %v435, %v554
  %v556 = vtanh.pop %v555
  %v557 = vsub.f32 1.0, %v553
  %v558 = vmul.f32 %v557, %v556
  %v559 = vmul.f32 %v553, %v429
  %v560 = vadd.f32 %v558, %v559
  %s561 = scalar_lea.vmem %s3, 24
  %562 = vst [vmem:[%s561] sm:$0xff] %v560
  %s563 = scalar_lea.vmem %s0, 96
  %v564 = vld [vmem:[%s563] sm:$0xff]
  %v565 = vld [vmem:[%s563 + $0x8] sm:$0xff]
  %v566 = vld [vmem:[%s563 + $0x10] sm:$0xff]
  %567 = vrot.lane.b32.xlu0 %v560, 9
  %v568 = vpop.permute.xlu0 %567
  %v569 = vmul.f32 %v568, %v22
  %570 = vrot.lane.b32.xlu0 %v560, 8
  %v571 = vpop.permute.xlu0 %570
  %v572 = vmul.f32 %v571, %v23
  %573 = vrot.lane.b32.xlu0 %v560, 7
  %v574 = vpop.permute.xlu0 %573
  %v575 = vmul.f32 %v574, %v24
  %576 = vrot.lane.b32.xlu0 %v560, 1
  %v577 = vpop.permute.xlu0 %576
  %v578 = vmul.f32 %v577, %v25
  %579 = vrot.lane.b32.xlu0 %v560, 127
  %v580 = vpop.permute.xlu0 %579
  %v581 = vmul.f32 %v580, %v26
  %582 = vrot.lane.b32.xlu0 %v560, 121
  %v583 = vpop.permute.xlu0 %582
  %v584 = vmul.f32 %v583, %v27
  %585 = vrot.lane.b32.xlu0 %v560, 120
  %v586 = vpop.permute.xlu0 %585
  %v587 = vmul.f32 %v586, %v28
  %588 = vrot.lane.b32.xlu0 %v560, 119
  %v589 = vpop.permute.xlu0 %588
  %v590 = vmul.f32 %v589, %v29
  %591 = vmatprep.subr.mxu0 0.0
  %592 = vmatpush1.msra.mxu0 0.0
  %593 = vmatprep.subr.mxu0 0.0
  %594 = vmatpush1.msra.mxu0 0.0
  %595 = vmatprep.subr.mxu0 0.0
  %596 = vmatpush1.msra.mxu0 0.0
  %597 = vmatprep.subr.mxu0 0.0
  %598 = vmatpush1.msra.mxu0 0.0
  %599 = vmatprep.subr.mxu0 0.0
  %600 = vmatpush1.msra.mxu0 0.0
  %601 = vmatprep.subr.mxu0 0.0
  %602 = vmatpush1.msra.mxu0 0.0
  %603 = vmatprep.subr.mxu0 0.0
  %604 = vmatpush1.msra.mxu0 0.0
  %605 = vmatprep.subr.mxu0 0.0
  %606 = vmatpush1.msra.mxu0 %v590
  %607 = vmatprep.subr.mxu0 0.0
  %608 = vmatpush1.msra.mxu0 %v587
  %609 = vmatprep.subr.mxu0 0.0
  %610 = vmatpush1.msra.mxu0 %v584
  %611 = vmatprep.subr.mxu0 0.0
  %612 = vmatpush1.msra.mxu0 %v581
  %613 = vmatprep.subr.mxu0 0.0
  %614 = vmatpush1.msra.mxu0 %v560
  %615 = vmatprep.subr.mxu0 0.0
  %616 = vmatpush1.msra.mxu0 %v578
  %617 = vmatprep.subr.mxu0 0.0
  %618 = vmatpush1.msra.mxu0 %v575
  %619 = vmatprep.subr.mxu0 0.0
  %620 = vmatpush1.msra.mxu0 %v572
  %621 = vmatprep.subr.mxu0 0.0
  %622 = vmatpush1.msra.mxu0 %v569
  %623 = vmatprep.subr.mxu0 0.0
  %624 = vmatpush2.msra.mxu0 0.0
  %625 = vmatprep.subr.mxu0 0.0
  %626 = vmatpush2.msra.mxu0 0.0
  %627 = vmatprep.subr.mxu0 0.0
  %628 = vmatpush2.msra.mxu0 0.0
  %629 = vmatprep.subr.mxu0 0.0
  %630 = vmatpush2.msra.mxu0 0.0
  %631 = vmatprep.subr.mxu0 0.0
  %632 = vmatpush2.msra.mxu0 0.0
  %633 = vmatprep.subr.mxu0 0.0
  %634 = vmatpush2.msra.mxu0 0.0
  %635 = vmatprep.subr.mxu0 0.0
  %636 = vmatpush2.msra.mxu0 0.0
  %637 = vmatprep.subr.mxu0 0.0
  %638 = vmatpush2.msra.mxu0 0.0
  %639 = vmatprep.subr.mxu0 0.0
  %640 = vmatpush2.msra.mxu0 0.0
  %641 = vmatprep.subr.mxu0 0.0
  %642 = vmatpush2.msra.mxu0 0.0
  %643 = vmatprep.subr.mxu0 0.0
  %644 = vmatpush2.msra.mxu0 0.0
  %645 = vmatprep.subr.mxu0 0.0
  %646 = vmatpush2.msra.mxu0 0.0
  %647 = vmatprep.subr.mxu0 0.0
  %648 = vmatpush2.msra.mxu0 0.0
  %649 = vmatprep.subr.mxu0 0.0
  %650 = vmatpush2.msra.mxu0 0.0
  %651 = vmatprep.subr.mxu0 0.0
  %652 = vmatpush2.msra.mxu0 0.0
  %653 = vmatprep.subr.mxu0 0.0
  %654 = vmatpush2.msra.mxu0 0.0
  %655 = vmatprep.mubr.f32.mxu0 0.0
  %656 = vmatmul.mubr.f32.gmra.mxu0 %v60
  %v657 = vpop.f32.mrf.mxu0
  %v658 = vadd.f32 0.0, %v657
  %v659 = vpop.f32.mrf.mxu0
  %660 = vmatprep.mubr.f32.mxu0 0.0
  %661 = vmatmul.mubr.f32.gmra.mxu0 %v63
  %v662 = vpop.f32.mrf.mxu0
  %v663 = vadd.f32 0.0, %v662
  %v664 = vpop.f32.mrf.mxu0
  %665 = vmatprep.mubr.f32.mxu0 0.0
  %666 = vmatmul.mubr.f32.gmra.mxu0 %v66
  %v667 = vpop.f32.mrf.mxu0
  %v668 = vadd.f32 0.0, %v667
  %v669 = vpop.f32.mrf.mxu0
  %670 = vdwg.mxu0
  %v671 = vadd.f32 %v564, %v658
  %v672 = vxor.u32 %v671, 2147483648
  %v673 = vmul.f32 %v672, 1.442695
  %v674 = vpow.pop %v673
  %v675 = vadd.f32 %v674, 1.0
  %v676 = vrcp.pop %v675
  %v677 = vmul.f32 1.0, %v676
  %v678 = vadd.f32 %v565, %v663
  %v679 = vxor.u32 %v678, 2147483648
  %v680 = vmul.f32 %v679, 1.442695
  %v681 = vpow.pop %v680
  %v682 = vadd.f32 %v681, 1.0
  %v683 = vrcp.pop %v682
  %v684 = vmul.f32 1.0, %v683
  %v685 = vmul.f32 %v677, %v668
  %v686 = vadd.f32 %v566, %v685
  %v687 = vtanh.pop %v686
  %v688 = vsub.f32 1.0, %v684
  %v689 = vmul.f32 %v688, %v687
  %v690 = vmul.f32 %v684, %v560
  %v691 = vadd.f32 %v689, %v690
  %s692 = scalar_lea.vmem %s3, 32
  %693 = vst [vmem:[%s692] sm:$0xff] %v691
  %s694 = scalar_lea.vmem %s0, 120
  %v695 = vld [vmem:[%s694] sm:$0xff]
  %v696 = vld [vmem:[%s694 + $0x8] sm:$0xff]
  %v697 = vld [vmem:[%s694 + $0x10] sm:$0xff]
  %698 = vrot.lane.b32.xlu0 %v691, 9
  %v699 = vpop.permute.xlu0 %698
  %v700 = vmul.f32 %v699, %v22
  %701 = vrot.lane.b32.xlu0 %v691, 8
  %v702 = vpop.permute.xlu0 %701
  %v703 = vmul.f32 %v702, %v23
  %704 = vrot.lane.b32.xlu0 %v691, 7
  %v705 = vpop.permute.xlu0 %704
  %v706 = vmul.f32 %v705, %v24
  %707 = vrot.lane.b32.xlu0 %v691, 1
  %v708 = vpop.permute.xlu0 %707
  %v709 = vmul.f32 %v708, %v25
  %710 = vrot.lane.b32.xlu0 %v691, 127
  %v711 = vpop.permute.xlu0 %710
  %v712 = vmul.f32 %v711, %v26
  %713 = vrot.lane.b32.xlu0 %v691, 121
  %v714 = vpop.permute.xlu0 %713
  %v715 = vmul.f32 %v714, %v27
  %716 = vrot.lane.b32.xlu0 %v691, 120
  %v717 = vpop.permute.xlu0 %716
  %v718 = vmul.f32 %v717, %v28
  %719 = vrot.lane.b32.xlu0 %v691, 119
  %v720 = vpop.permute.xlu0 %719
  %v721 = vmul.f32 %v720, %v29
  %722 = vmatprep.subr.mxu0 0.0
  %723 = vmatpush1.msra.mxu0 0.0
  %724 = vmatprep.subr.mxu0 0.0
  %725 = vmatpush1.msra.mxu0 0.0
  %726 = vmatprep.subr.mxu0 0.0
  %727 = vmatpush1.msra.mxu0 0.0
  %728 = vmatprep.subr.mxu0 0.0
  %729 = vmatpush1.msra.mxu0 0.0
  %730 = vmatprep.subr.mxu0 0.0
  %731 = vmatpush1.msra.mxu0 0.0
  %732 = vmatprep.subr.mxu0 0.0
  %733 = vmatpush1.msra.mxu0 0.0
  %734 = vmatprep.subr.mxu0 0.0
  %735 = vmatpush1.msra.mxu0 0.0
  %736 = vmatprep.subr.mxu0 0.0
  %737 = vmatpush1.msra.mxu0 %v721
  %738 = vmatprep.subr.mxu0 0.0
  %739 = vmatpush1.msra.mxu0 %v718
  %740 = vmatprep.subr.mxu0 0.0
  %741 = vmatpush1.msra.mxu0 %v715
  %742 = vmatprep.subr.mxu0 0.0
  %743 = vmatpush1.msra.mxu0 %v712
  %744 = vmatprep.subr.mxu0 0.0
  %745 = vmatpush1.msra.mxu0 %v691
  %746 = vmatprep.subr.mxu0 0.0
  %747 = vmatpush1.msra.mxu0 %v709
  %748 = vmatprep.subr.mxu0 0.0
  %749 = vmatpush1.msra.mxu0 %v706
  %750 = vmatprep.subr.mxu0 0.0
  %751 = vmatpush1.msra.mxu0 %v703
  %752 = vmatprep.subr.mxu0 0.0
  %753 = vmatpush1.msra.mxu0 %v700
  %754 = vmatprep.subr.mxu0 0.0
  %755 = vmatpush2.msra.mxu0 0.0
  %756 = vmatprep.subr.mxu0 0.0
  %757 = vmatpush2.msra.mxu0 0.0
  %758 = vmatprep.subr.mxu0 0.0
  %759 = vmatpush2.msra.mxu0 0.0
  %760 = vmatprep.subr.mxu0 0.0
  %761 = vmatpush2.msra.mxu0 0.0
  %762 = vmatprep.subr.mxu0 0.0
  %763 = vmatpush2.msra.mxu0 0.0
  %764 = vmatprep.subr.mxu0 0.0
  %765 = vmatpush2.msra.mxu0 0.0
  %766 = vmatprep.subr.mxu0 0.0
  %767 = vmatpush2.msra.mxu0 0.0
  %768 = vmatprep.subr.mxu0 0.0
  %769 = vmatpush2.msra.mxu0 0.0
  %770 = vmatprep.subr.mxu0 0.0
  %771 = vmatpush2.msra.mxu0 0.0
  %772 = vmatprep.subr.mxu0 0.0
  %773 = vmatpush2.msra.mxu0 0.0
  %774 = vmatprep.subr.mxu0 0.0
  %775 = vmatpush2.msra.mxu0 0.0
  %776 = vmatprep.subr.mxu0 0.0
  %777 = vmatpush2.msra.mxu0 0.0
  %778 = vmatprep.subr.mxu0 0.0
  %779 = vmatpush2.msra.mxu0 0.0
  %780 = vmatprep.subr.mxu0 0.0
  %781 = vmatpush2.msra.mxu0 0.0
  %782 = vmatprep.subr.mxu0 0.0
  %783 = vmatpush2.msra.mxu0 0.0
  %784 = vmatprep.subr.mxu0 0.0
  %785 = vmatpush2.msra.mxu0 0.0
  %786 = vmatprep.mubr.f32.mxu0 0.0
  %787 = vmatmul.mubr.f32.gmra.mxu0 %v60
  %v788 = vpop.f32.mrf.mxu0
  %v789 = vadd.f32 0.0, %v788
  %v790 = vpop.f32.mrf.mxu0
  %791 = vmatprep.mubr.f32.mxu0 0.0
  %792 = vmatmul.mubr.f32.gmra.mxu0 %v63
  %v793 = vpop.f32.mrf.mxu0
  %v794 = vadd.f32 0.0, %v793
  %v795 = vpop.f32.mrf.mxu0
  %796 = vmatprep.mubr.f32.mxu0 0.0
  %797 = vmatmul.mubr.f32.gmra.mxu0 %v66
  %v798 = vpop.f32.mrf.mxu0
  %v799 = vadd.f32 0.0, %v798
  %v800 = vpop.f32.mrf.mxu0
  %801 = vdwg.mxu0
  %v802 = vadd.f32 %v695, %v789
  %v803 = vxor.u32 %v802, 2147483648
  %v804 = vmul.f32 %v803, 1.442695
  %v805 = vpow.pop %v804
  %v806 = vadd.f32 %v805, 1.0
  %v807 = vrcp.pop %v806
  %v808 = vmul.f32 1.0, %v807
  %v809 = vadd.f32 %v696, %v794
  %v810 = vxor.u32 %v809, 2147483648
  %v811 = vmul.f32 %v810, 1.442695
  %v812 = vpow.pop %v811
  %v813 = vadd.f32 %v812, 1.0
  %v814 = vrcp.pop %v813
  %v815 = vmul.f32 1.0, %v814
  %v816 = vmul.f32 %v808, %v799
  %v817 = vadd.f32 %v697, %v816
  %v818 = vtanh.pop %v817
  %v819 = vsub.f32 1.0, %v815
  %v820 = vmul.f32 %v819, %v818
  %v821 = vmul.f32 %v815, %v691
  %v822 = vadd.f32 %v820, %v821
  %s823 = scalar_lea.vmem %s3, 40
  %824 = vst [vmem:[%s823] sm:$0xff] %v822
  %s825 = scalar_lea.vmem %s0, 144
  %v826 = vld [vmem:[%s825] sm:$0xff]
  %v827 = vld [vmem:[%s825 + $0x8] sm:$0xff]
  %v828 = vld [vmem:[%s825 + $0x10] sm:$0xff]
  %829 = vrot.lane.b32.xlu0 %v822, 9
  %v830 = vpop.permute.xlu0 %829
  %v831 = vmul.f32 %v830, %v22
  %832 = vrot.lane.b32.xlu0 %v822, 8
  %v833 = vpop.permute.xlu0 %832
  %v834 = vmul.f32 %v833, %v23
  %835 = vrot.lane.b32.xlu0 %v822, 7
  %v836 = vpop.permute.xlu0 %835
  %v837 = vmul.f32 %v836, %v24
  %838 = vrot.lane.b32.xlu0 %v822, 1
  %v839 = vpop.permute.xlu0 %838
  %v840 = vmul.f32 %v839, %v25
  %841 = vrot.lane.b32.xlu0 %v822, 127
  %v842 = vpop.permute.xlu0 %841
  %v843 = vmul.f32 %v842, %v26
  %844 = vrot.lane.b32.xlu0 %v822, 121
  %v845 = vpop.permute.xlu0 %844
  %v846 = vmul.f32 %v845, %v27
  %847 = vrot.lane.b32.xlu0 %v822, 120
  %v848 = vpop.permute.xlu0 %847
  %v849 = vmul.f32 %v848, %v28
  %850 = vrot.lane.b32.xlu0 %v822, 119
  %v851 = vpop.permute.xlu0 %850
  %v852 = vmul.f32 %v851, %v29
  %853 = vmatprep.subr.mxu0 0.0
  %854 = vmatpush1.msra.mxu0 0.0
  %855 = vmatprep.subr.mxu0 0.0
  %856 = vmatpush1.msra.mxu0 0.0
  %857 = vmatprep.subr.mxu0 0.0
  %858 = vmatpush1.msra.mxu0 0.0
  %859 = vmatprep.subr.mxu0 0.0
  %860 = vmatpush1.msra.mxu0 0.0
  %861 = vmatprep.subr.mxu0 0.0
  %862 = vmatpush1.msra.mxu0 0.0
  %863 = vmatprep.subr.mxu0 0.0
  %864 = vmatpush1.msra.mxu0 0.0
  %865 = vmatprep.subr.mxu0 0.0
  %866 = vmatpush1.msra.mxu0 0.0
  %867 = vmatprep.subr.mxu0 0.0
  %868 = vmatpush1.msra.mxu0 %v852
  %869 = vmatprep.subr.mxu0 0.0
  %870 = vmatpush1.msra.mxu0 %v849
  %871 = vmatprep.subr.mxu0 0.0
  %872 = vmatpush1.msra.mxu0 %v846
  %873 = vmatprep.subr.mxu0 0.0
  %874 = vmatpush1.msra.mxu0 %v843
  %875 = vmatprep.subr.mxu0 0.0
  %876 = vmatpush1.msra.mxu0 %v822
  %877 = vmatprep.subr.mxu0 0.0
  %878 = vmatpush1.msra.mxu0 %v840
  %879 = vmatprep.subr.mxu0 0.0
  %880 = vmatpush1.msra.mxu0 %v837
  %881 = vmatprep.subr.mxu0 0.0
  %882 = vmatpush1.msra.mxu0 %v834
  %883 = vmatprep.subr.mxu0 0.0
  %884 = vmatpush1.msra.mxu0 %v831
  %885 = vmatprep.subr.mxu0 0.0
  %886 = vmatpush2.msra.mxu0 0.0
  %887 = vmatprep.subr.mxu0 0.0
  %888 = vmatpush2.msra.mxu0 0.0
  %889 = vmatprep.subr.mxu0 0.0
  %890 = vmatpush2.msra.mxu0 0.0
  %891 = vmatprep.subr.mxu0 0.0
  %892 = vmatpush2.msra.mxu0 0.0
  %893 = vmatprep.subr.mxu0 0.0
  %894 = vmatpush2.msra.mxu0 0.0
  %895 = vmatprep.subr.mxu0 0.0
  %896 = vmatpush2.msra.mxu0 0.0
  %897 = vmatprep.subr.mxu0 0.0
  %898 = vmatpush2.msra.mxu0 0.0
  %899 = vmatprep.subr.mxu0 0.0
  %900 = vmatpush2.msra.mxu0 0.0
  %901 = vmatprep.subr.mxu0 0.0
  %902 = vmatpush2.msra.mxu0 0.0
  %903 = vmatprep.subr.mxu0 0.0
  %904 = vmatpush2.msra.mxu0 0.0
  %905 = vmatprep.subr.mxu0 0.0
  %906 = vmatpush2.msra.mxu0 0.0
  %907 = vmatprep.subr.mxu0 0.0
  %908 = vmatpush2.msra.mxu0 0.0
  %909 = vmatprep.subr.mxu0 0.0
  %910 = vmatpush2.msra.mxu0 0.0
  %911 = vmatprep.subr.mxu0 0.0
  %912 = vmatpush2.msra.mxu0 0.0
  %913 = vmatprep.subr.mxu0 0.0
  %914 = vmatpush2.msra.mxu0 0.0
  %915 = vmatprep.subr.mxu0 0.0
  %916 = vmatpush2.msra.mxu0 0.0
  %917 = vmatprep.mubr.f32.mxu0 0.0
  %918 = vmatmul.mubr.f32.gmra.mxu0 %v60
  %v919 = vpop.f32.mrf.mxu0
  %v920 = vadd.f32 0.0, %v919
  %v921 = vpop.f32.mrf.mxu0
  %922 = vmatprep.mubr.f32.mxu0 0.0
  %923 = vmatmul.mubr.f32.gmra.mxu0 %v63
  %v924 = vpop.f32.mrf.mxu0
  %v925 = vadd.f32 0.0, %v924
  %v926 = vpop.f32.mrf.mxu0
  %927 = vmatprep.mubr.f32.mxu0 0.0
  %928 = vmatmul.mubr.f32.gmra.mxu0 %v66
  %v929 = vpop.f32.mrf.mxu0
  %v930 = vadd.f32 0.0, %v929
  %v931 = vpop.f32.mrf.mxu0
  %932 = vdwg.mxu0
  %v933 = vadd.f32 %v826, %v920
  %v934 = vxor.u32 %v933, 2147483648
  %v935 = vmul.f32 %v934, 1.442695
  %v936 = vpow.pop %v935
  %v937 = vadd.f32 %v936, 1.0
  %v938 = vrcp.pop %v937
  %v939 = vmul.f32 1.0, %v938
  %v940 = vadd.f32 %v827, %v925
  %v941 = vxor.u32 %v940, 2147483648
  %v942 = vmul.f32 %v941, 1.442695
  %v943 = vpow.pop %v942
  %v944 = vadd.f32 %v943, 1.0
  %v945 = vrcp.pop %v944
  %v946 = vmul.f32 1.0, %v945
  %v947 = vmul.f32 %v939, %v930
  %v948 = vadd.f32 %v828, %v947
  %v949 = vtanh.pop %v948
  %v950 = vsub.f32 1.0, %v946
  %v951 = vmul.f32 %v950, %v949
  %v952 = vmul.f32 %v946, %v822
  %v953 = vadd.f32 %v951, %v952
  %s954 = scalar_lea.vmem %s3, 48
  %955 = vst [vmem:[%s954] sm:$0xff] %v953
  %s956 = scalar_lea.vmem %s0, 168
  %v957 = vld [vmem:[%s956] sm:$0xff]
  %v958 = vld [vmem:[%s956 + $0x8] sm:$0xff]
  %v959 = vld [vmem:[%s956 + $0x10] sm:$0xff]
  %960 = vrot.lane.b32.xlu0 %v953, 9
  %v961 = vpop.permute.xlu0 %960
  %v962 = vmul.f32 %v961, %v22
  %963 = vrot.lane.b32.xlu0 %v953, 8
  %v964 = vpop.permute.xlu0 %963
  %v965 = vmul.f32 %v964, %v23
  %966 = vrot.lane.b32.xlu0 %v953, 7
  %v967 = vpop.permute.xlu0 %966
  %v968 = vmul.f32 %v967, %v24
  %969 = vrot.lane.b32.xlu0 %v953, 1
  %v970 = vpop.permute.xlu0 %969
  %v971 = vmul.f32 %v970, %v25
  %972 = vrot.lane.b32.xlu0 %v953, 127
  %v973 = vpop.permute.xlu0 %972
  %v974 = vmul.f32 %v973, %v26
  %975 = vrot.lane.b32.xlu0 %v953, 121
  %v976 = vpop.permute.xlu0 %975
  %v977 = vmul.f32 %v976, %v27
  %978 = vrot.lane.b32.xlu0 %v953, 120
  %v979 = vpop.permute.xlu0 %978
  %v980 = vmul.f32 %v979, %v28
  %981 = vrot.lane.b32.xlu0 %v953, 119
  %v982 = vpop.permute.xlu0 %981
  %v983 = vmul.f32 %v982, %v29
  %984 = vmatprep.subr.mxu0 0.0
  %985 = vmatpush1.msra.mxu0 0.0
  %986 = vmatprep.subr.mxu0 0.0
  %987 = vmatpush1.msra.mxu0 0.0
  %988 = vmatprep.subr.mxu0 0.0
  %989 = vmatpush1.msra.mxu0 0.0
  %990 = vmatprep.subr.mxu0 0.0
  %991 = vmatpush1.msra.mxu0 0.0
  %992 = vmatprep.subr.mxu0 0.0
  %993 = vmatpush1.msra.mxu0 0.0
  %994 = vmatprep.subr.mxu0 0.0
  %995 = vmatpush1.msra.mxu0 0.0
  %996 = vmatprep.subr.mxu0 0.0
  %997 = vmatpush1.msra.mxu0 0.0
  %998 = vmatprep.subr.mxu0 0.0
  %999 = vmatpush1.msra.mxu0 %v983
  %1000 = vmatprep.subr.mxu0 0.0
  %1001 = vmatpush1.msra.mxu0 %v980
  %1002 = vmatprep.subr.mxu0 0.0
  %1003 = vmatpush1.msra.mxu0 %v977
  %1004 = vmatprep.subr.mxu0 0.0
  %1005 = vmatpush1.msra.mxu0 %v974
  %1006 = vmatprep.subr.mxu0 0.0
  %1007 = vmatpush1.msra.mxu0 %v953
  %1008 = vmatprep.subr.mxu0 0.0
  %1009 = vmatpush1.msra.mxu0 %v971
  %1010 = vmatprep.subr.mxu0 0.0
  %1011 = vmatpush1.msra.mxu0 %v968
  %1012 = vmatprep.subr.mxu0 0.0
  %1013 = vmatpush1.msra.mxu0 %v965
  %1014 = vmatprep.subr.mxu0 0.0
  %1015 = vmatpush1.msra.mxu0 %v962
  %1016 = vmatprep.subr.mxu0 0.0
  %1017 = vmatpush2.msra.mxu0 0.0
  %1018 = vmatprep.subr.mxu0 0.0
  %1019 = vmatpush2.msra.mxu0 0.0
  %1020 = vmatprep.subr.mxu0 0.0
  %1021 = vmatpush2.msra.mxu0 0.0
  %1022 = vmatprep.subr.mxu0 0.0
  %1023 = vmatpush2.msra.mxu0 0.0
  %1024 = vmatprep.subr.mxu0 0.0
  %1025 = vmatpush2.msra.mxu0 0.0
  %1026 = vmatprep.subr.mxu0 0.0
  %1027 = vmatpush2.msra.mxu0 0.0
  %1028 = vmatprep.subr.mxu0 0.0
  %1029 = vmatpush2.msra.mxu0 0.0
  %1030 = vmatprep.subr.mxu0 0.0
  %1031 = vmatpush2.msra.mxu0 0.0
  %1032 = vmatprep.subr.mxu0 0.0
  %1033 = vmatpush2.msra.mxu0 0.0
  %1034 = vmatprep.subr.mxu0 0.0
  %1035 = vmatpush2.msra.mxu0 0.0
  %1036 = vmatprep.subr.mxu0 0.0
  %1037 = vmatpush2.msra.mxu0 0.0
  %1038 = vmatprep.subr.mxu0 0.0
  %1039 = vmatpush2.msra.mxu0 0.0
  %1040 = vmatprep.subr.mxu0 0.0
  %1041 = vmatpush2.msra.mxu0 0.0
  %1042 = vmatprep.subr.mxu0 0.0
  %1043 = vmatpush2.msra.mxu0 0.0
  %1044 = vmatprep.subr.mxu0 0.0
  %1045 = vmatpush2.msra.mxu0 0.0
  %1046 = vmatprep.subr.mxu0 0.0
  %1047 = vmatpush2.msra.mxu0 0.0
  %1048 = vmatprep.mubr.f32.mxu0 0.0
  %1049 = vmatmul.mubr.f32.gmra.mxu0 %v60
  %v1050 = vpop.f32.mrf.mxu0
  %v1051 = vadd.f32 0.0, %v1050
  %v1052 = vpop.f32.mrf.mxu0
  %1053 = vmatprep.mubr.f32.mxu0 0.0
  %1054 = vmatmul.mubr.f32.gmra.mxu0 %v63
  %v1055 = vpop.f32.mrf.mxu0
  %v1056 = vadd.f32 0.0, %v1055
  %v1057 = vpop.f32.mrf.mxu0
  %1058 = vmatprep.mubr.f32.mxu0 0.0
  %1059 = vmatmul.mubr.f32.gmra.mxu0 %v66
  %v1060 = vpop.f32.mrf.mxu0
  %v1061 = vadd.f32 0.0, %v1060
  %v1062 = vpop.f32.mrf.mxu0
  %1063 = vdwg.mxu0
  %v1064 = vadd.f32 %v957, %v1051
  %v1065 = vxor.u32 %v1064, 2147483648
  %v1066 = vmul.f32 %v1065, 1.442695
  %v1067 = vpow.pop %v1066
  %v1068 = vadd.f32 %v1067, 1.0
  %v1069 = vrcp.pop %v1068
  %v1070 = vmul.f32 1.0, %v1069
  %v1071 = vadd.f32 %v958, %v1056
  %v1072 = vxor.u32 %v1071, 2147483648
  %v1073 = vmul.f32 %v1072, 1.442695
  %v1074 = vpow.pop %v1073
  %v1075 = vadd.f32 %v1074, 1.0
  %v1076 = vrcp.pop %v1075
  %v1077 = vmul.f32 1.0, %v1076
  %v1078 = vmul.f32 %v1070, %v1061
  %v1079 = vadd.f32 %v959, %v1078
  %v1080 = vtanh.pop %v1079
  %v1081 = vsub.f32 1.0, %v1077
  %v1082 = vmul.f32 %v1081, %v1080
  %v1083 = vmul.f32 %v1077, %v953
  %v1084 = vadd.f32 %v1082, %v1083
  %s1085 = scalar_lea.vmem %s3, 56
  %1086 = vst [vmem:[%s1085] sm:$0xff] %v1084
  %1087 = vst [vmem:[#allocation2] sm:$0xff] %v1084
  // Predicated region
  $region18: #{rgru_forward.2} parent=0 // pred_check
    _
  $region19: #{rgru_forward.2} parent=0 // pred_check_branch
    %1089 = sbr.rel (0) target = $region21
  $region20: #{rgru_forward.2} parent=0 // pred_region
    _
  $region21: #{rgru_forward.2} parent=0 // pred_fallthru
    _
  // Predicated region
  $region22: #{rgru_forward.2} parent=0 // pred_check
    _
  $region23: #{rgru_forward.2} parent=0 // pred_check_branch
    %1091 = sbr.rel (0) target = $region25
  $region24: #{rgru_forward.2} parent=0 // pred_region
    _
  $region25: #{rgru_forward.2} parent=0 // pred_fallthru
    _

</llo_original>
